<compile_context>
chip_gen: v6e
topology: v6e:2x2x1
jax: 0.10.0
libtpu: 0.0.40
codegen_flags: <defaults>
</compile_context>

<pallas_src>
import functools

import jax
import jax.numpy as jnp
from jax import lax
from jax.experimental import pallas as pl
from jax.experimental.pallas import tpu as pltpu


# ----------------------------------------------------------------------------
# Fused kernel: all LSTM layers + final FC in one pallas_call, grid = (L,)
# ----------------------------------------------------------------------------
def _fused_lstm_fc_kernel(emb_ref, wih0_ref, wih_ref, whh_ref, b_ref,
                          h0_ref, c0_ref, fcw_ref, fcb_ref,
                          out_ref, hn_ref, cn_ref,
                          act_scr, gates_scr):
    """Grid = (num_layers,), sequential ('arbitrary').

    emb_ref   : (T*Bp, E)   bf16 embedded input, t-major rows (resident)
    wih0_ref  : (E, 4H)     bf16 layer-0 input weights (transposed, [i,f,o,g])
    wih_ref   : (1, H, 4H)  bf16 this layer's input weights (layers >= 1)
    whh_ref   : (1, H, 4H)  bf16 this layer's recurrent weights
    b_ref     : (1, 1, 4H)  f32 summed biases b_ih + b_hh
    h0/c0_ref : (1, Bp, H)  f32 initial state for this layer
    fcw_ref   : (H, Op) bf16, fcb_ref: (1, Op) f32  final Linear (lane-padded)
    out_ref   : (T*Bp, Op)  f32 FC output (written at last layer only)
    hn/cn_ref : (1, Bp, H)  f32 final state for this layer
    act_scr   : (T*Bp, H)   f32 VMEM: this layer's hidden outputs for all t
    gates_scr : (T*Bp, 4H)  f32 VMEM: precomputed input projection for all t
    """
    layer = pl.program_id(0)
    n_layers = pl.num_programs(0)
    Bp, H = h0_ref.shape[1], h0_ref.shape[2]
    TB = gates_scr.shape[0]
    T = TB // Bp

    bias = b_ref[0]                                   # (1, 4H) f32

    # --- input projection for the WHOLE sequence: one bf16 MXU matmul -------
    @pl.when(layer == 0)
    def _():
        gates_scr[...] = (jnp.dot(emb_ref[...], wih0_ref[...],
                                  preferred_element_type=jnp.float32) + bias)

    @pl.when(layer > 0)
    def _():
        # act_scr still holds the previous layer's (T*Bp, H) activations.
        gates_scr[...] = (jnp.dot(act_scr[...].astype(jnp.bfloat16), wih_ref[0],
                                  preferred_element_type=jnp.float32) + bias)

    # --- recurrence: only h @ W_hh left inside the serial loop --------------
    whh = whh_ref[0]                                  # (H, 4H) bf16, hoisted

    def step(t, carry):
        h, c = carry                                  # f32 (Bp, H) in vregs
        row = pl.multiple_of(t * Bp, Bp)              # 8-aligned sublane start
        gates = gates_scr[pl.ds(row, Bp), :] + jnp.dot(
            h.astype(jnp.bfloat16), whh,
            preferred_element_type=jnp.float32)       # (Bp, 4H) f32
        # Gate layout is [i | f | o | g]: one contiguous sigmoid, one tanh.
        sig = jax.nn.sigmoid(gates[:, :3 * H])
        g = jnp.tanh(gates[:, 3 * H:])
        i = sig[:, 0:H]
        f = sig[:, H:2 * H]
        o = sig[:, 2 * H:3 * H]
        c_new = f * c + i * g
        h_new = o * jnp.tanh(c_new)
        act_scr[pl.ds(row, Bp), :] = h_new            # stays in VMEM
        return (h_new, c_new)

    h_fin, c_fin = lax.fori_loop(0, T, step, (h0_ref[0], c0_ref[0]),
                                 unroll=min(T, 8))
    hn_ref[0] = h_fin                                 # single final writeback
    cn_ref[0] = c_fin

    # --- fused FC over the last layer's full activation slab ----------------
    @pl.when(layer == n_layers - 1)
    def _():
        out_ref[...] = (jnp.dot(act_scr[...].astype(jnp.bfloat16), fcw_ref[...],
                                preferred_element_type=jnp.float32)
                        + fcb_ref[...])


# ----------------------------------------------------------------------------
# Wrapper
# ----------------------------------------------------------------------------
@functools.partial(jax.jit, static_argnames=("out_dim",))
def lstm_demo_forward(kparams, x, out_dim, h0=None, c0=None):
    """Mirrors LSTM_demo.forward.  x: (T, B) int32 token ids (seq-first)."""
    L, H = kparams["w_hh_t"].shape[0], kparams["w_hh_t"].shape[1]
    E = kparams["embedding"].shape[1]
    Op = kparams["fc_w_t"].shape[1]
    O = out_dim
    T, B = x.shape

    if h0 is None or c0 is None:
        h0 = jnp.zeros((L, B, H), jnp.float32)
        c0 = jnp.zeros((L, B, H), jnp.float32)

    # Pad batch to a full sublane group (>=8) for aligned slices / better MXU M.
    Bp = max(8, ((B + 7) // 8) * 8)
    pad = Bp - B

    # Embedding lookup (data-dependent gather) -- glue in plain JAX.
    emb = jnp.take(kparams["embedding"], x, axis=0)               # (T, B, E)
    emb = jnp.pad(emb, ((0, 0), (0, pad), (0, 0)))                # (T, Bp, E)
    emb2d = emb.reshape(T * Bp, E).astype(jnp.bfloat16)           # bf16 MXU LHS
    h0p = jnp.pad(h0, ((0, 0), (0, pad), (0, 0)))                 # (L, Bp, H)
    c0p = jnp.pad(c0, ((0, 0), (0, pad), (0, 0)))

    out2d, hn, cn = pl.pallas_call(
        _fused_lstm_fc_kernel,
        out_shape=(jax.ShapeDtypeStruct((T * Bp, Op), jnp.float32),
                   jax.ShapeDtypeStruct((L, Bp, H), jnp.float32),
                   jax.ShapeDtypeStruct((L, Bp, H), jnp.float32)),
        grid_spec=pltpu.PrefetchScalarGridSpec(
            num_scalar_prefetch=0,
            grid=(L,),
            in_specs=[
                pl.BlockSpec((T * Bp, E), lambda l: (0, 0)),       # emb (resident)
                pl.BlockSpec((E, 4 * H), lambda l: (0, 0)),        # w_ih layer 0
                # layers 1..L-1 only; clamped so l==0 just pre-fetches block 0
                pl.BlockSpec((1, H, 4 * H),
                             lambda l: (jnp.maximum(l - 1, 0), 0, 0)),
                pl.BlockSpec((1, H, 4 * H), lambda l: (l, 0, 0)),  # w_hh
                pl.BlockSpec((1, 1, 4 * H), lambda l: (l, 0, 0)),  # bias
                pl.BlockSpec((1, Bp, H), lambda l: (l, 0, 0)),     # h0
                pl.BlockSpec((1, Bp, H), lambda l: (l, 0, 0)),     # c0
                pl.BlockSpec((H, Op), lambda l: (0, 0)),           # fc weight
                pl.BlockSpec((1, Op), lambda l: (0, 0)),           # fc bias
            ],
            out_specs=[
                pl.BlockSpec((T * Bp, Op), lambda l: (0, 0)),      # fc out (lane-dense)
                pl.BlockSpec((1, Bp, H), lambda l: (l, 0, 0)),     # h_n
                pl.BlockSpec((1, Bp, H), lambda l: (l, 0, 0)),     # c_n
            ],
            scratch_shapes=[pltpu.VMEM((T * Bp, H), jnp.float32),      # act
                            pltpu.VMEM((T * Bp, 4 * H), jnp.float32)]  # gates
        ),
        compiler_params=pltpu.CompilerParams(
            dimension_semantics=("arbitrary",)),
    )(emb2d, kparams["w_ih0_t"], kparams["w_ih_t"], kparams["w_hh_t"],
      kparams["b"], h0p, c0p, kparams["fc_w_t"], kparams["fc_b"])

    out = out2d.reshape(T, Bp, Op)[:, :B, :O]                     # (T, B, O)
    return out, (hn[:, :B, :], cn[:, :B, :])


# ----------------------------------------------------------------------------
# Canonical (PyTorch-layout) params and kernel-layout conversion
# ----------------------------------------------------------------------------
def init_params(key, input_size, embedding_size, hidden_size, num_layers,
                output_size):
    """Canonical params: same shapes / gate order [i,f,g,o] as nn.LSTM."""
    H = hidden_size
    k = 1.0 / float(jnp.sqrt(jnp.float32(H)))
    keys = jax.random.split(key, 1 + 4 * num_layers + 2)
    params = {"embedding": jax.random.normal(
        keys[0], (input_size, embedding_size), jnp.float32)}

    w_ih, w_hh, b_ih, b_hh = [], [], [], []
    idx = 1
    for l in range(num_layers):
        in_dim = embedding_size if l == 0 else H
        w_ih.append(jax.random.uniform(keys[idx], (4 * H, in_dim),
                                       jnp.float32, -k, k)); idx += 1
        w_hh.append(jax.random.uniform(keys[idx], (4 * H, H),
                                       jnp.float32, -k, k)); idx += 1
        b_ih.append(jax.random.uniform(keys[idx], (4 * H,),
                                       jnp.float32, -k, k)); idx += 1
        b_hh.append(jax.random.uniform(keys[idx], (4 * H,),
                                       jnp.float32, -k, k)); idx += 1
    params.update(w_ih=w_ih, w_hh=w_hh, b_ih=b_ih, b_hh=b_hh)
    params["fc_w"] = jax.random.uniform(keys[idx], (output_size, H),
                                        jnp.float32, -k, k); idx += 1
    params["fc_b"] = jax.random.uniform(keys[idx], (output_size,),
                                        jnp.float32, -k, k)
    return params


def prepare_kernel_params(params):
    """Pack / reorder / cast canonical params for the fused kernel."""
    L = len(params["w_hh"])
    H = params["w_hh"][0].shape[1]
    O = params["fc_w"].shape[0]
    Op = max(128, ((O + 127) // 128) * 128)          # lane-dense FC output

    def reorder(w):                                   # [i,f,g,o] -> [i,f,o,g]
        i, f, g, o = jnp.split(w, 4, axis=0)
        return jnp.concatenate([i, f, o, g], axis=0)

    kp = {"embedding": params["embedding"]}
    kp["w_ih0_t"] = reorder(params["w_ih"][0]).T.astype(jnp.bfloat16)  # (E,4H)
    if L > 1:
        kp["w_ih_t"] = jnp.stack(
            [reorder(params["w_ih"][l]).T for l in range(1, L)],
            0).astype(jnp.bfloat16)                                    # (L-1,H,4H)
    else:
        kp["w_ih_t"] = jnp.zeros((1, H, 4 * H), jnp.bfloat16)          # never read
    kp["w_hh_t"] = jnp.stack(
        [reorder(params["w_hh"][l]).T for l in range(L)],
        0).astype(jnp.bfloat16)                                        # (L,H,4H)
    kp["b"] = jnp.stack(
        [reorder(params["b_ih"][l] + params["b_hh"][l]).reshape(1, -1)
         for l in range(L)], 0)                                        # (L,1,4H) f32
    kp["fc_w_t"] = jnp.pad(params["fc_w"].T,
                           ((0, 0), (0, Op - O))).astype(jnp.bfloat16)  # (H,Op)
    kp["fc_b"] = jnp.pad(params["fc_b"], (0, Op - O)).reshape(1, -1)    # (1,Op) f32
    return kp


# ----------------------------------------------------------------------------
# Pure-JAX reference (canonical PyTorch semantics; optional bf16 matmul mode)
# ----------------------------------------------------------------------------
def reference_forward(params, x, h0=None, c0=None, matmul_dtype=None):
    L = len(params["w_hh"])
    H = params["w_hh"][0].shape[1]
    T, B = x.shape
    if h0 is None or c0 is None:
        h0 = jnp.zeros((L, B, H), jnp.float32)
        c0 = jnp.zeros((L, B, H), jnp.float32)

    def mm(a, w_t):
        if matmul_dtype is None:
            return jnp.dot(a, w_t)
        return jnp.dot(a.astype(matmul_dtype), w_t.astype(matmul_dtype),
                       preferred_element_type=jnp.float32)

    layer_in = jnp.take(params["embedding"], x, axis=0)
    h_fin, c_fin = [], []
    for l in range(L):
        w_ih_t = params["w_ih"][l].T
        w_hh_t = params["w_hh"][l].T
        b = params["b_ih"][l] + params["b_hh"][l]

        def step(carry, x_t, w_ih_t=w_ih_t, w_hh_t=w_hh_t, b=b):
            h, c = carry
            gates = mm(x_t, w_ih_t) + mm(h, w_hh_t) + b
            i, f, g, o = jnp.split(gates, 4, axis=-1)
            i, f, o = jax.nn.sigmoid(i), jax.nn.sigmoid(f), jax.nn.sigmoid(o)
            g = jnp.tanh(g)
            c_new = f * c + i * g
            h_new = o * jnp.tanh(c_new)
            return (h_new, c_new), h_new

        (hT, cT), out = lax.scan(step, (h0[l], c0[l]), layer_in)
        layer_in = out
        h_fin.append(hT)
        c_fin.append(cT)

    out = mm(layer_in, params["fc_w"].T) + params["fc_b"]
    return out, (jnp.stack(h_fin, 0), jnp.stack(c_fin, 0))


# ----------------------------------------------------------------------------
if __name__ == "__main__":
    VOCAB, EMB, HIDDEN, LAYERS, OUT = 16, 32, 32, 2, 16
    SEQ, BATCH = 8, 4

    root = jax.random.PRNGKey(0)
    k_param, k_x = jax.random.split(root)
    params = init_params(k_param, VOCAB, EMB, HIDDEN, LAYERS, OUT)
    kparams = prepare_kernel_params(params)
    x = jax.random.randint(k_x, (SEQ, BATCH), 0, VOCAB, dtype=jnp.int32)

    out, (h_n, c_n) = lstm_demo_forward(kparams, x, out_dim=OUT)
    jax.block_until_ready((out, h_n, c_n))

    # Numerics-matched reference (bf16 matmul operands, f32 accumulation).
    mp_out, (mp_h, mp_c) = reference_forward(params, x,
                                             matmul_dtype=jnp.bfloat16)
    # Pure-f32 reference (PyTorch semantics); bf16 MXU operands cost O(1e-2).
    ref_out, (ref_h, ref_c) = reference_forward(params, x)

    assert out.shape == (SEQ, BATCH, OUT)
    assert h_n.shape == (LAYERS, BATCH, HIDDEN)
    assert c_n.shape == (LAYERS, BATCH, HIDDEN)
    assert jnp.allclose(out, mp_out, atol=5e-3, rtol=5e-3)
    assert jnp.allclose(h_n, mp_h, atol=5e-3, rtol=5e-3)
    assert jnp.allclose(c_n, mp_c, atol=5e-3, rtol=5e-3)
    assert jnp.allclose(out, ref_out, atol=1e-1, rtol=1e-1)
    assert jnp.allclose(h_n, ref_h, atol=1e-1, rtol=1e-1)
    assert jnp.allclose(c_n, ref_c, atol=1e-1, rtol=1e-1)

    print("KERNEL_OK")
</pallas_src>

<mosaic_0001>
module attributes {stable_mosaic.version = 11 : i64} {
  func.func @_fused_lstm_fc_kernel(%arg0: i32, %arg1: memref<64x32xbf16, #tpu.memory_space<vmem>>, %arg2: memref<32x128xbf16, #tpu.memory_space<vmem>>, %arg3: memref<1x32x128xbf16, #tpu.memory_space<vmem>>, %arg4: memref<1x32x128xbf16, #tpu.memory_space<vmem>>, %arg5: memref<1x1x128xf32, #tpu.memory_space<vmem>>, %arg6: memref<1x8x32xf32, #tpu.memory_space<vmem>>, %arg7: memref<1x8x32xf32, #tpu.memory_space<vmem>>, %arg8: memref<32x128xbf16, #tpu.memory_space<vmem>>, %arg9: memref<1x128xf32, #tpu.memory_space<vmem>>, %arg10: memref<64x128xf32, #tpu.memory_space<vmem>>, %arg11: memref<1x8x32xf32, #tpu.memory_space<vmem>>, %arg12: memref<1x8x32xf32, #tpu.memory_space<vmem>>, %arg13: memref<64x32xf32, #tpu.memory_space<vmem>>, %arg14: memref<64x128xf32, #tpu.memory_space<vmem>>) attributes {dimension_semantics = [#tpu.dimension_semantics<arbitrary>], iteration_bounds = array<i64: 2>, scalar_prefetch = 0 : i64, scratch_operands = 2 : i64, tpu.core_type = #tpu.core_type<tc>, window_params = [{pipeline_mode = #tpu.pipeline_mode<synchronous>, transform_indices = @transform_0, window_bounds = array<i64: 64, 32>}, {pipeline_mode = #tpu.pipeline_mode<synchronous>, transform_indices = @transform_1, window_bounds = array<i64: 32, 128>}, {transform_indices = @transform_2, window_bounds = array<i64: 1, 32, 128>}, {transform_indices = @transform_3, window_bounds = array<i64: 1, 32, 128>}, {transform_indices = @transform_4, window_bounds = array<i64: 1, 1, 128>}, {transform_indices = @transform_5, window_bounds = array<i64: 1, 8, 32>}, {transform_indices = @transform_6, window_bounds = array<i64: 1, 8, 32>}, {pipeline_mode = #tpu.pipeline_mode<synchronous>, transform_indices = @transform_7, window_bounds = array<i64: 32, 128>}, {pipeline_mode = #tpu.pipeline_mode<synchronous>, transform_indices = @transform_8, window_bounds = array<i64: 1, 128>}, {pipeline_mode = #tpu.pipeline_mode<synchronous>, transform_indices = @transform_9, window_bounds = array<i64: 64, 128>}, {transform_indices = @transform_10, window_bounds = array<i64: 1, 8, 32>}, {transform_indices = @transform_11, window_bounds = array<i64: 1, 8, 32>}]} {
    %c0 = arith.constant 0 : index
    %c0_0 = arith.constant 0 : index
    %c0_1 = arith.constant 0 : index
    %0 = vector.load %arg5[%c0, %c0_0, %c0_1] : memref<1x1x128xf32, #tpu.memory_space<vmem>>, vector<1x1x128xf32>
    %1 = vector.shape_cast %0 : vector<1x1x128xf32> to vector<1x128xf32>
    %c0_i32 = arith.constant 0 : i32
    %2 = arith.cmpi eq, %arg0, %c0_i32 : i32
    %3 = arith.extui %2 : i1 to i32
    %c0_i32_2 = arith.constant 0 : i32
    %4 = arith.cmpi ne, %3, %c0_i32_2 : i32
    scf.if %4 {
      %c0_62 = arith.constant 0 : index
      %c0_63 = arith.constant 0 : index
      %223 = vector.load %arg1[%c0_62, %c0_63] : memref<64x32xbf16, #tpu.memory_space<vmem>>, vector<64x32xbf16>
      %c0_64 = arith.constant 0 : index
      %c0_65 = arith.constant 0 : index
      %224 = vector.load %arg2[%c0_64, %c0_65] : memref<32x128xbf16, #tpu.memory_space<vmem>>, vector<32x128xbf16>
      %cst_66 = arith.constant dense<0.000000e+00> : vector<64x128xf32>
      %225 = tpu.matmul %223, %224, %cst_66 {dimension_numbers = #tpu.dot_dimension_numbers<[1], [0], [0], [1], [0, 0, 1, 1], [], []>} : vector<64x32xbf16>, vector<32x128xbf16>, vector<64x128xf32> -> vector<64x128xf32>
      %226 = vector.broadcast %1 : vector<1x128xf32> to vector<64x128xf32>
      %227 = arith.addf %225, %226 : vector<64x128xf32>
      %c0_67 = arith.constant 0 : index
      %c0_68 = arith.constant 0 : index
      %228 = vector.load %arg14[%c0_67, %c0_68] : memref<64x128xf32, #tpu.memory_space<vmem>>, vector<64x128xf32>
      tpu.vector_store %arg14[%c0_67, %c0_68], %227 {strides = array<i32>} : memref<64x128xf32, #tpu.memory_space<vmem>>, vector<64x128xf32>,
    } else {
    }
    %c0_i32_3 = arith.constant 0 : i32
    %5 = arith.cmpi sgt, %arg0, %c0_i32_3 : i32
    %6 = arith.extui %5 : i1 to i32
    %c0_i32_4 = arith.constant 0 : i32
    %7 = arith.cmpi ne, %6, %c0_i32_4 : i32
    scf.if %7 {
      %c0_62 = arith.constant 0 : index
      %c0_63 = arith.constant 0 : index
      %223 = vector.load %arg13[%c0_62, %c0_63] : memref<64x32xf32, #tpu.memory_space<vmem>>, vector<64x32xf32>
      %224 = arith.truncf %223 : vector<64x32xf32> to vector<64x32xbf16>
      %c0_64 = arith.constant 0 : index
      %c0_65 = arith.constant 0 : index
      %c0_66 = arith.constant 0 : index
      %225 = vector.load %arg3[%c0_64, %c0_65, %c0_66] : memref<1x32x128xbf16, #tpu.memory_space<vmem>>, vector<1x32x128xbf16>
      %226 = vector.shape_cast %225 : vector<1x32x128xbf16> to vector<32x128xbf16>
      %cst_67 = arith.constant dense<0.000000e+00> : vector<64x128xf32>
      %227 = tpu.matmul %224, %226, %cst_67 {dimension_numbers = #tpu.dot_dimension_numbers<[1], [0], [0], [1], [0, 0, 1, 1], [], []>} : vector<64x32xbf16>, vector<32x128xbf16>, vector<64x128xf32> -> vector<64x128xf32>
      %228 = vector.broadcast %1 : vector<1x128xf32> to vector<64x128xf32>
      %229 = arith.addf %227, %228 : vector<64x128xf32>
      %c0_68 = arith.constant 0 : index
      %c0_69 = arith.constant 0 : index
      %230 = vector.load %arg14[%c0_68, %c0_69] : memref<64x128xf32, #tpu.memory_space<vmem>>, vector<64x128xf32>
      tpu.vector_store %arg14[%c0_68, %c0_69], %229 {strides = array<i32>} : memref<64x128xf32, #tpu.memory_space<vmem>>, vector<64x128xf32>,
    } else {
    }
    %c0_5 = arith.constant 0 : index
    %c0_6 = arith.constant 0 : index
    %c0_7 = arith.constant 0 : index
    %8 = vector.load %arg4[%c0_5, %c0_6, %c0_7] : memref<1x32x128xbf16, #tpu.memory_space<vmem>>, vector<1x32x128xbf16>
    %9 = vector.shape_cast %8 : vector<1x32x128xbf16> to vector<32x128xbf16>
    %c0_8 = arith.constant 0 : index
    %c0_9 = arith.constant 0 : index
    %c0_10 = arith.constant 0 : index
    %10 = vector.load %arg6[%c0_8, %c0_9, %c0_10] : memref<1x8x32xf32, #tpu.memory_space<vmem>>, vector<1x8x32xf32>
    %11 = vector.shape_cast %10 : vector<1x8x32xf32> to vector<8x32xf32>
    %c0_11 = arith.constant 0 : index
    %c0_12 = arith.constant 0 : index
    %c0_13 = arith.constant 0 : index
    %12 = vector.load %arg7[%c0_11, %c0_12, %c0_13] : memref<1x8x32xf32, #tpu.memory_space<vmem>>, vector<1x8x32xf32>
    %13 = vector.shape_cast %12 : vector<1x8x32xf32> to vector<8x32xf32>
    %c0_i32_14 = arith.constant 0 : i32
    %c8_i32 = arith.constant 8 : i32
    %14 = arith.muli %c0_i32_14, %c8_i32 : i32
    %15 = tpu.assume_multiple %14, 8 : i32
    %16 = arith.index_cast %15 : i32 to index
    %c0_15 = arith.constant 0 : index
    %17 = vector.load %arg14[%16, %c0_15] : memref<64x128xf32, #tpu.memory_space<vmem>>, vector<8x128xf32>
    %18 = arith.truncf %11 : vector<8x32xf32> to vector<8x32xbf16>
    %cst = arith.constant dense<0.000000e+00> : vector<8x128xf32>
    %19 = tpu.matmul %18, %9, %cst {dimension_numbers = #tpu.dot_dimension_numbers<[1], [0], [0], [1], [0, 0, 1, 1], [], []>} : vector<8x32xbf16>, vector<32x128xbf16>, vector<8x128xf32> -> vector<8x128xf32>
    %20 = arith.addf %17, %19 : vector<8x128xf32>
    %21 = vector.extract_strided_slice %20 {offsets = [0, 0], sizes = [8, 96], strides = [1, 1]} : vector<8x128xf32> to vector<8x96xf32>
    %22 = arith.negf %21 : vector<8x96xf32>
    %23 = math.exp %22 : vector<8x96xf32>
    %cst_16 = arith.constant 1.000000e+00 : f32
    %24 = vector.broadcast %cst_16 : f32 to vector<8x96xf32>
    %25 = arith.addf %24, %23 : vector<8x96xf32>
    %26 = arith.divf %24, %25 : vector<8x96xf32>
    %27 = vector.extract_strided_slice %20 {offsets = [0, 96], sizes = [8, 32], strides = [1, 1]} : vector<8x128xf32> to vector<8x32xf32>
    %28 = math.tanh %27 : vector<8x32xf32>
    %29 = vector.extract_strided_slice %26 {offsets = [0, 0], sizes = [8, 32], strides = [1, 1]} : vector<8x96xf32> to vector<8x32xf32>
    %30 = vector.extract_strided_slice %26 {offsets = [0, 32], sizes = [8, 32], strides = [1, 1]} : vector<8x96xf32> to vector<8x32xf32>
    %31 = vector.extract_strided_slice %26 {offsets = [0, 64], sizes = [8, 32], strides = [1, 1]} : vector<8x96xf32> to vector<8x32xf32>
    %32 = arith.mulf %30, %13 : vector<8x32xf32>
    %33 = arith.mulf %29, %28 : vector<8x32xf32>
    %34 = arith.addf %32, %33 : vector<8x32xf32>
    %35 = math.tanh %34 : vector<8x32xf32>
    %36 = arith.mulf %31, %35 : vector<8x32xf32>
    %37 = arith.index_cast %15 : i32 to index
    %c0_17 = arith.constant 0 : index
    %38 = vector.load %arg13[%37, %c0_17] : memref<64x32xf32, #tpu.memory_space<vmem>>, vector<8x32xf32>
    tpu.vector_store %arg13[%37, %c0_17], %36 {strides = array<i32>} : memref<64x32xf32, #tpu.memory_space<vmem>>, vector<8x32xf32>,
    %c1_i32 = arith.constant 1 : i32
    %c8_i32_18 = arith.constant 8 : i32
    %39 = arith.muli %c1_i32, %c8_i32_18 : i32
    %40 = tpu.assume_multiple %39, 8 : i32
    %41 = arith.index_cast %40 : i32 to index
    %c0_19 = arith.constant 0 : index
    %42 = vector.load %arg14[%41, %c0_19] : memref<64x128xf32, #tpu.memory_space<vmem>>, vector<8x128xf32>
    %43 = arith.truncf %36 : vector<8x32xf32> to vector<8x32xbf16>
    %cst_20 = arith.constant dense<0.000000e+00> : vector<8x128xf32>
    %44 = tpu.matmul %43, %9, %cst_20 {dimension_numbers = #tpu.dot_dimension_numbers<[1], [0], [0], [1], [0, 0, 1, 1], [], []>} : vector<8x32xbf16>, vector<32x128xbf16>, vector<8x128xf32> -> vector<8x128xf32>
    %45 = arith.addf %42, %44 : vector<8x128xf32>
    %46 = vector.extract_strided_slice %45 {offsets = [0, 0], sizes = [8, 96], strides = [1, 1]} : vector<8x128xf32> to vector<8x96xf32>
    %47 = arith.negf %46 : vector<8x96xf32>
    %48 = math.exp %47 : vector<8x96xf32>
    %cst_21 = arith.constant 1.000000e+00 : f32
    %49 = vector.broadcast %cst_21 : f32 to vector<8x96xf32>
    %50 = arith.addf %49, %48 : vector<8x96xf32>
    %51 = arith.divf %49, %50 : vector<8x96xf32>
    %52 = vector.extract_strided_slice %45 {offsets = [0, 96], sizes = [8, 32], strides = [1, 1]} : vector<8x128xf32> to vector<8x32xf32>
    %53 = math.tanh %52 : vector<8x32xf32>
    %54 = vector.extract_strided_slice %51 {offsets = [0, 0], sizes = [8, 32], strides = [1, 1]} : vector<8x96xf32> to vector<8x32xf32>
    %55 = vector.extract_strided_slice %51 {offsets = [0, 32], sizes = [8, 32], strides = [1, 1]} : vector<8x96xf32> to vector<8x32xf32>
    %56 = vector.extract_strided_slice %51 {offsets = [0, 64], sizes = [8, 32], strides = [1, 1]} : vector<8x96xf32> to vector<8x32xf32>
    %57 = arith.mulf %55, %34 : vector<8x32xf32>
    %58 = arith.mulf %54, %53 : vector<8x32xf32>
    %59 = arith.addf %57, %58 : vector<8x32xf32>
    %60 = math.tanh %59 : vector<8x32xf32>
    %61 = arith.mulf %56, %60 : vector<8x32xf32>
    %62 = arith.index_cast %40 : i32 to index
    %c0_22 = arith.constant 0 : index
    %63 = vector.load %arg13[%62, %c0_22] : memref<64x32xf32, #tpu.memory_space<vmem>>, vector<8x32xf32>
    tpu.vector_store %arg13[%62, %c0_22], %61 {strides = array<i32>} : memref<64x32xf32, #tpu.memory_space<vmem>>, vector<8x32xf32>,
    %c2_i32 = arith.constant 2 : i32
    %c8_i32_23 = arith.constant 8 : i32
    %64 = arith.muli %c2_i32, %c8_i32_23 : i32
    %65 = tpu.assume_multiple %64, 8 : i32
    %66 = arith.index_cast %65 : i32 to index
    %c0_24 = arith.constant 0 : index
    %67 = vector.load %arg14[%66, %c0_24] : memref<64x128xf32, #tpu.memory_space<vmem>>, vector<8x128xf32>
    %68 = arith.truncf %61 : vector<8x32xf32> to vector<8x32xbf16>
    %cst_25 = arith.constant dense<0.000000e+00> : vector<8x128xf32>
    %69 = tpu.matmul %68, %9, %cst_25 {dimension_numbers = #tpu.dot_dimension_numbers<[1], [0], [0], [1], [0, 0, 1, 1], [], []>} : vector<8x32xbf16>, vector<32x128xbf16>, vector<8x128xf32> -> vector<8x128xf32>
    %70 = arith.addf %67, %69 : vector<8x128xf32>
    %71 = vector.extract_strided_slice %70 {offsets = [0, 0], sizes = [8, 96], strides = [1, 1]} : vector<8x128xf32> to vector<8x96xf32>
    %72 = arith.negf %71 : vector<8x96xf32>
    %73 = math.exp %72 : vector<8x96xf32>
    %cst_26 = arith.constant 1.000000e+00 : f32
    %74 = vector.broadcast %cst_26 : f32 to vector<8x96xf32>
    %75 = arith.addf %74, %73 : vector<8x96xf32>
    %76 = arith.divf %74, %75 : vector<8x96xf32>
    %77 = vector.extract_strided_slice %70 {offsets = [0, 96], sizes = [8, 32], strides = [1, 1]} : vector<8x128xf32> to vector<8x32xf32>
    %78 = math.tanh %77 : vector<8x32xf32>
    %79 = vector.extract_strided_slice %76 {offsets = [0, 0], sizes = [8, 32], strides = [1, 1]} : vector<8x96xf32> to vector<8x32xf32>
    %80 = vector.extract_strided_slice %76 {offsets = [0, 32], sizes = [8, 32], strides = [1, 1]} : vector<8x96xf32> to vector<8x32xf32>
    %81 = vector.extract_strided_slice %76 {offsets = [0, 64], sizes = [8, 32], strides = [1, 1]} : vector<8x96xf32> to vector<8x32xf32>
    %82 = arith.mulf %80, %59 : vector<8x32xf32>
    %83 = arith.mulf %79, %78 : vector<8x32xf32>
    %84 = arith.addf %82, %83 : vector<8x32xf32>
    %85 = math.tanh %84 : vector<8x32xf32>
    %86 = arith.mulf %81, %85 : vector<8x32xf32>
    %87 = arith.index_cast %65 : i32 to index
    %c0_27 = arith.constant 0 : index
    %88 = vector.load %arg13[%87, %c0_27] : memref<64x32xf32, #tpu.memory_space<vmem>>, vector<8x32xf32>
    tpu.vector_store %arg13[%87, %c0_27], %86 {strides = array<i32>} : memref<64x32xf32, #tpu.memory_space<vmem>>, vector<8x32xf32>,
    %c3_i32 = arith.constant 3 : i32
    %c8_i32_28 = arith.constant 8 : i32
    %89 = arith.muli %c3_i32, %c8_i32_28 : i32
    %90 = tpu.assume_multiple %89, 8 : i32
    %91 = arith.index_cast %90 : i32 to index
    %c0_29 = arith.constant 0 : index
    %92 = vector.load %arg14[%91, %c0_29] : memref<64x128xf32, #tpu.memory_space<vmem>>, vector<8x128xf32>
    %93 = arith.truncf %86 : vector<8x32xf32> to vector<8x32xbf16>
    %cst_30 = arith.constant dense<0.000000e+00> : vector<8x128xf32>
    %94 = tpu.matmul %93, %9, %cst_30 {dimension_numbers = #tpu.dot_dimension_numbers<[1], [0], [0], [1], [0, 0, 1, 1], [], []>} : vector<8x32xbf16>, vector<32x128xbf16>, vector<8x128xf32> -> vector<8x128xf32>
    %95 = arith.addf %92, %94 : vector<8x128xf32>
    %96 = vector.extract_strided_slice %95 {offsets = [0, 0], sizes = [8, 96], strides = [1, 1]} : vector<8x128xf32> to vector<8x96xf32>
    %97 = arith.negf %96 : vector<8x96xf32>
    %98 = math.exp %97 : vector<8x96xf32>
    %cst_31 = arith.constant 1.000000e+00 : f32
    %99 = vector.broadcast %cst_31 : f32 to vector<8x96xf32>
    %100 = arith.addf %99, %98 : vector<8x96xf32>
    %101 = arith.divf %99, %100 : vector<8x96xf32>
    %102 = vector.extract_strided_slice %95 {offsets = [0, 96], sizes = [8, 32], strides = [1, 1]} : vector<8x128xf32> to vector<8x32xf32>
    %103 = math.tanh %102 : vector<8x32xf32>
    %104 = vector.extract_strided_slice %101 {offsets = [0, 0], sizes = [8, 32], strides = [1, 1]} : vector<8x96xf32> to vector<8x32xf32>
    %105 = vector.extract_strided_slice %101 {offsets = [0, 32], sizes = [8, 32], strides = [1, 1]} : vector<8x96xf32> to vector<8x32xf32>
    %106 = vector.extract_strided_slice %101 {offsets = [0, 64], sizes = [8, 32], strides = [1, 1]} : vector<8x96xf32> to vector<8x32xf32>
    %107 = arith.mulf %105, %84 : vector<8x32xf32>
    %108 = arith.mulf %104, %103 : vector<8x32xf32>
    %109 = arith.addf %107, %108 : vector<8x32xf32>
    %110 = math.tanh %109 : vector<8x32xf32>
    %111 = arith.mulf %106, %110 : vector<8x32xf32>
    %112 = arith.index_cast %90 : i32 to index
    %c0_32 = arith.constant 0 : index
    %113 = vector.load %arg13[%112, %c0_32] : memref<64x32xf32, #tpu.memory_space<vmem>>, vector<8x32xf32>
    tpu.vector_store %arg13[%112, %c0_32], %111 {strides = array<i32>} : memref<64x32xf32, #tpu.memory_space<vmem>>, vector<8x32xf32>,
    %c4_i32 = arith.constant 4 : i32
    %c8_i32_33 = arith.constant 8 : i32
    %114 = arith.muli %c4_i32, %c8_i32_33 : i32
    %115 = tpu.assume_multiple %114, 8 : i32
    %116 = arith.index_cast %115 : i32 to index
    %c0_34 = arith.constant 0 : index
    %117 = vector.load %arg14[%116, %c0_34] : memref<64x128xf32, #tpu.memory_space<vmem>>, vector<8x128xf32>
    %118 = arith.truncf %111 : vector<8x32xf32> to vector<8x32xbf16>
    %cst_35 = arith.constant dense<0.000000e+00> : vector<8x128xf32>
    %119 = tpu.matmul %118, %9, %cst_35 {dimension_numbers = #tpu.dot_dimension_numbers<[1], [0], [0], [1], [0, 0, 1, 1], [], []>} : vector<8x32xbf16>, vector<32x128xbf16>, vector<8x128xf32> -> vector<8x128xf32>
    %120 = arith.addf %117, %119 : vector<8x128xf32>
    %121 = vector.extract_strided_slice %120 {offsets = [0, 0], sizes = [8, 96], strides = [1, 1]} : vector<8x128xf32> to vector<8x96xf32>
    %122 = arith.negf %121 : vector<8x96xf32>
    %123 = math.exp %122 : vector<8x96xf32>
    %cst_36 = arith.constant 1.000000e+00 : f32
    %124 = vector.broadcast %cst_36 : f32 to vector<8x96xf32>
    %125 = arith.addf %124, %123 : vector<8x96xf32>
    %126 = arith.divf %124, %125 : vector<8x96xf32>
    %127 = vector.extract_strided_slice %120 {offsets = [0, 96], sizes = [8, 32], strides = [1, 1]} : vector<8x128xf32> to vector<8x32xf32>
    %128 = math.tanh %127 : vector<8x32xf32>
    %129 = vector.extract_strided_slice %126 {offsets = [0, 0], sizes = [8, 32], strides = [1, 1]} : vector<8x96xf32> to vector<8x32xf32>
    %130 = vector.extract_strided_slice %126 {offsets = [0, 32], sizes = [8, 32], strides = [1, 1]} : vector<8x96xf32> to vector<8x32xf32>
    %131 = vector.extract_strided_slice %126 {offsets = [0, 64], sizes = [8, 32], strides = [1, 1]} : vector<8x96xf32> to vector<8x32xf32>
    %132 = arith.mulf %130, %109 : vector<8x32xf32>
    %133 = arith.mulf %129, %128 : vector<8x32xf32>
    %134 = arith.addf %132, %133 : vector<8x32xf32>
    %135 = math.tanh %134 : vector<8x32xf32>
    %136 = arith.mulf %131, %135 : vector<8x32xf32>
    %137 = arith.index_cast %115 : i32 to index
    %c0_37 = arith.constant 0 : index
    %138 = vector.load %arg13[%137, %c0_37] : memref<64x32xf32, #tpu.memory_space<vmem>>, vector<8x32xf32>
    tpu.vector_store %arg13[%137, %c0_37], %136 {strides = array<i32>} : memref<64x32xf32, #tpu.memory_space<vmem>>, vector<8x32xf32>,
    %c5_i32 = arith.constant 5 : i32
    %c8_i32_38 = arith.constant 8 : i32
    %139 = arith.muli %c5_i32, %c8_i32_38 : i32
    %140 = tpu.assume_multiple %139, 8 : i32
    %141 = arith.index_cast %140 : i32 to index
    %c0_39 = arith.constant 0 : index
    %142 = vector.load %arg14[%141, %c0_39] : memref<64x128xf32, #tpu.memory_space<vmem>>, vector<8x128xf32>
    %143 = arith.truncf %136 : vector<8x32xf32> to vector<8x32xbf16>
    %cst_40 = arith.constant dense<0.000000e+00> : vector<8x128xf32>
    %144 = tpu.matmul %143, %9, %cst_40 {dimension_numbers = #tpu.dot_dimension_numbers<[1], [0], [0], [1], [0, 0, 1, 1], [], []>} : vector<8x32xbf16>, vector<32x128xbf16>, vector<8x128xf32> -> vector<8x128xf32>
    %145 = arith.addf %142, %144 : vector<8x128xf32>
    %146 = vector.extract_strided_slice %145 {offsets = [0, 0], sizes = [8, 96], strides = [1, 1]} : vector<8x128xf32> to vector<8x96xf32>
    %147 = arith.negf %146 : vector<8x96xf32>
    %148 = math.exp %147 : vector<8x96xf32>
    %cst_41 = arith.constant 1.000000e+00 : f32
    %149 = vector.broadcast %cst_41 : f32 to vector<8x96xf32>
    %150 = arith.addf %149, %148 : vector<8x96xf32>
    %151 = arith.divf %149, %150 : vector<8x96xf32>
    %152 = vector.extract_strided_slice %145 {offsets = [0, 96], sizes = [8, 32], strides = [1, 1]} : vector<8x128xf32> to vector<8x32xf32>
    %153 = math.tanh %152 : vector<8x32xf32>
    %154 = vector.extract_strided_slice %151 {offsets = [0, 0], sizes = [8, 32], strides = [1, 1]} : vector<8x96xf32> to vector<8x32xf32>
    %155 = vector.extract_strided_slice %151 {offsets = [0, 32], sizes = [8, 32], strides = [1, 1]} : vector<8x96xf32> to vector<8x32xf32>
    %156 = vector.extract_strided_slice %151 {offsets = [0, 64], sizes = [8, 32], strides = [1, 1]} : vector<8x96xf32> to vector<8x32xf32>
    %157 = arith.mulf %155, %134 : vector<8x32xf32>
    %158 = arith.mulf %154, %153 : vector<8x32xf32>
    %159 = arith.addf %157, %158 : vector<8x32xf32>
    %160 = math.tanh %159 : vector<8x32xf32>
    %161 = arith.mulf %156, %160 : vector<8x32xf32>
    %162 = arith.index_cast %140 : i32 to index
    %c0_42 = arith.constant 0 : index
    %163 = vector.load %arg13[%162, %c0_42] : memref<64x32xf32, #tpu.memory_space<vmem>>, vector<8x32xf32>
    tpu.vector_store %arg13[%162, %c0_42], %161 {strides = array<i32>} : memref<64x32xf32, #tpu.memory_space<vmem>>, vector<8x32xf32>,
    %c6_i32 = arith.constant 6 : i32
    %c8_i32_43 = arith.constant 8 : i32
    %164 = arith.muli %c6_i32, %c8_i32_43 : i32
    %165 = tpu.assume_multiple %164, 8 : i32
    %166 = arith.index_cast %165 : i32 to index
    %c0_44 = arith.constant 0 : index
    %167 = vector.load %arg14[%166, %c0_44] : memref<64x128xf32, #tpu.memory_space<vmem>>, vector<8x128xf32>
    %168 = arith.truncf %161 : vector<8x32xf32> to vector<8x32xbf16>
    %cst_45 = arith.constant dense<0.000000e+00> : vector<8x128xf32>
    %169 = tpu.matmul %168, %9, %cst_45 {dimension_numbers = #tpu.dot_dimension_numbers<[1], [0], [0], [1], [0, 0, 1, 1], [], []>} : vector<8x32xbf16>, vector<32x128xbf16>, vector<8x128xf32> -> vector<8x128xf32>
    %170 = arith.addf %167, %169 : vector<8x128xf32>
    %171 = vector.extract_strided_slice %170 {offsets = [0, 0], sizes = [8, 96], strides = [1, 1]} : vector<8x128xf32> to vector<8x96xf32>
    %172 = arith.negf %171 : vector<8x96xf32>
    %173 = math.exp %172 : vector<8x96xf32>
    %cst_46 = arith.constant 1.000000e+00 : f32
    %174 = vector.broadcast %cst_46 : f32 to vector<8x96xf32>
    %175 = arith.addf %174, %173 : vector<8x96xf32>
    %176 = arith.divf %174, %175 : vector<8x96xf32>
    %177 = vector.extract_strided_slice %170 {offsets = [0, 96], sizes = [8, 32], strides = [1, 1]} : vector<8x128xf32> to vector<8x32xf32>
    %178 = math.tanh %177 : vector<8x32xf32>
    %179 = vector.extract_strided_slice %176 {offsets = [0, 0], sizes = [8, 32], strides = [1, 1]} : vector<8x96xf32> to vector<8x32xf32>
    %180 = vector.extract_strided_slice %176 {offsets = [0, 32], sizes = [8, 32], strides = [1, 1]} : vector<8x96xf32> to vector<8x32xf32>
    %181 = vector.extract_strided_slice %176 {offsets = [0, 64], sizes = [8, 32], strides = [1, 1]} : vector<8x96xf32> to vector<8x32xf32>
    %182 = arith.mulf %180, %159 : vector<8x32xf32>
    %183 = arith.mulf %179, %178 : vector<8x32xf32>
    %184 = arith.addf %182, %183 : vector<8x32xf32>
    %185 = math.tanh %184 : vector<8x32xf32>
    %186 = arith.mulf %181, %185 : vector<8x32xf32>
    %187 = arith.index_cast %165 : i32 to index
    %c0_47 = arith.constant 0 : index
    %188 = vector.load %arg13[%187, %c0_47] : memref<64x32xf32, #tpu.memory_space<vmem>>, vector<8x32xf32>
    tpu.vector_store %arg13[%187, %c0_47], %186 {strides = array<i32>} : memref<64x32xf32, #tpu.memory_space<vmem>>, vector<8x32xf32>,
    %c7_i32 = arith.constant 7 : i32
    %c8_i32_48 = arith.constant 8 : i32
    %189 = arith.muli %c7_i32, %c8_i32_48 : i32
    %190 = tpu.assume_multiple %189, 8 : i32
    %191 = arith.index_cast %190 : i32 to index
    %c0_49 = arith.constant 0 : index
    %192 = vector.load %arg14[%191, %c0_49] : memref<64x128xf32, #tpu.memory_space<vmem>>, vector<8x128xf32>
    %193 = arith.truncf %186 : vector<8x32xf32> to vector<8x32xbf16>
    %cst_50 = arith.constant dense<0.000000e+00> : vector<8x128xf32>
    %194 = tpu.matmul %193, %9, %cst_50 {dimension_numbers = #tpu.dot_dimension_numbers<[1], [0], [0], [1], [0, 0, 1, 1], [], []>} : vector<8x32xbf16>, vector<32x128xbf16>, vector<8x128xf32> -> vector<8x128xf32>
    %195 = arith.addf %192, %194 : vector<8x128xf32>
    %196 = vector.extract_strided_slice %195 {offsets = [0, 0], sizes = [8, 96], strides = [1, 1]} : vector<8x128xf32> to vector<8x96xf32>
    %197 = arith.negf %196 : vector<8x96xf32>
    %198 = math.exp %197 : vector<8x96xf32>
    %cst_51 = arith.constant 1.000000e+00 : f32
    %199 = vector.broadcast %cst_51 : f32 to vector<8x96xf32>
    %200 = arith.addf %199, %198 : vector<8x96xf32>
    %201 = arith.divf %199, %200 : vector<8x96xf32>
    %202 = vector.extract_strided_slice %195 {offsets = [0, 96], sizes = [8, 32], strides = [1, 1]} : vector<8x128xf32> to vector<8x32xf32>
    %203 = math.tanh %202 : vector<8x32xf32>
    %204 = vector.extract_strided_slice %201 {offsets = [0, 0], sizes = [8, 32], strides = [1, 1]} : vector<8x96xf32> to vector<8x32xf32>
    %205 = vector.extract_strided_slice %201 {offsets = [0, 32], sizes = [8, 32], strides = [1, 1]} : vector<8x96xf32> to vector<8x32xf32>
    %206 = vector.extract_strided_slice %201 {offsets = [0, 64], sizes = [8, 32], strides = [1, 1]} : vector<8x96xf32> to vector<8x32xf32>
    %207 = arith.mulf %205, %184 : vector<8x32xf32>
    %208 = arith.mulf %204, %203 : vector<8x32xf32>
    %209 = arith.addf %207, %208 : vector<8x32xf32>
    %210 = math.tanh %209 : vector<8x32xf32>
    %211 = arith.mulf %206, %210 : vector<8x32xf32>
    %212 = arith.index_cast %190 : i32 to index
    %c0_52 = arith.constant 0 : index
    %213 = vector.load %arg13[%212, %c0_52] : memref<64x32xf32, #tpu.memory_space<vmem>>, vector<8x32xf32>
    tpu.vector_store %arg13[%212, %c0_52], %211 {strides = array<i32>} : memref<64x32xf32, #tpu.memory_space<vmem>>, vector<8x32xf32>,
    %c8_i32_53 = arith.constant 8 : i32
    %c0_54 = arith.constant 0 : index
    %c0_55 = arith.constant 0 : index
    %c0_56 = arith.constant 0 : index
    %214 = vector.load %arg11[%c0_54, %c0_55, %c0_56] : memref<1x8x32xf32, #tpu.memory_space<vmem>>, vector<1x8x32xf32>
    %215 = vector.shape_cast %214 : vector<1x8x32xf32> to vector<8x32xf32>
    %216 = vector.shape_cast %211 : vector<8x32xf32> to vector<1x8x32xf32>
    tpu.vector_store %arg11[%c0_54, %c0_55, %c0_56], %216 {strides = array<i32>} : memref<1x8x32xf32, #tpu.memory_space<vmem>>, vector<1x8x32xf32>,
    %c0_57 = arith.constant 0 : index
    %c0_58 = arith.constant 0 : index
    %c0_59 = arith.constant 0 : index
    %217 = vector.load %arg12[%c0_57, %c0_58, %c0_59] : memref<1x8x32xf32, #tpu.memory_space<vmem>>, vector<1x8x32xf32>
    %218 = vector.shape_cast %217 : vector<1x8x32xf32> to vector<8x32xf32>
    %219 = vector.shape_cast %209 : vector<8x32xf32> to vector<1x8x32xf32>
    tpu.vector_store %arg12[%c0_57, %c0_58, %c0_59], %219 {strides = array<i32>} : memref<1x8x32xf32, #tpu.memory_space<vmem>>, vector<1x8x32xf32>,
    %c1_i32_60 = arith.constant 1 : i32
    %220 = arith.cmpi eq, %arg0, %c1_i32_60 : i32
    %221 = arith.extui %220 : i1 to i32
    %c0_i32_61 = arith.constant 0 : i32
    %222 = arith.cmpi ne, %221, %c0_i32_61 : i32
    scf.if %222 {
      %c0_62 = arith.constant 0 : index
      %c0_63 = arith.constant 0 : index
      %223 = vector.load %arg13[%c0_62, %c0_63] : memref<64x32xf32, #tpu.memory_space<vmem>>, vector<64x32xf32>
      %224 = arith.truncf %223 : vector<64x32xf32> to vector<64x32xbf16>
      %c0_64 = arith.constant 0 : index
      %c0_65 = arith.constant 0 : index
      %225 = vector.load %arg8[%c0_64, %c0_65] : memref<32x128xbf16, #tpu.memory_space<vmem>>, vector<32x128xbf16>
      %cst_66 = arith.constant dense<0.000000e+00> : vector<64x128xf32>
      %226 = tpu.matmul %224, %225, %cst_66 {dimension_numbers = #tpu.dot_dimension_numbers<[1], [0], [0], [1], [0, 0, 1, 1], [], []>} : vector<64x32xbf16>, vector<32x128xbf16>, vector<64x128xf32> -> vector<64x128xf32>
      %c0_67 = arith.constant 0 : index
      %c0_68 = arith.constant 0 : index
      %227 = vector.load %arg9[%c0_67, %c0_68] : memref<1x128xf32, #tpu.memory_space<vmem>>, vector<1x128xf32>
      %228 = vector.broadcast %227 : vector<1x128xf32> to vector<64x128xf32>
      %229 = arith.addf %226, %228 : vector<64x128xf32>
      %c0_69 = arith.constant 0 : index
      %c0_70 = arith.constant 0 : index
      %230 = vector.load %arg10[%c0_69, %c0_70] : memref<64x128xf32, #tpu.memory_space<vmem>>, vector<64x128xf32>
      tpu.vector_store %arg10[%c0_69, %c0_70], %229 {strides = array<i32>} : memref<64x128xf32, #tpu.memory_space<vmem>>, vector<64x128xf32>,
    } else {
    }
    return
  }
  func.func @transform_0(%arg0: i32) -> (i32, i32) {
    %c0_i32 = arith.constant 0 : i32
    %c0_i32_0 = arith.constant 0 : i32
    %c0_i32_1 = arith.constant 0 : i32
    return %c0_i32, %c0_i32_0 : i32, i32
  }
  func.func @transform_1(%arg0: i32) -> (i32, i32) {
    %c0_i32 = arith.constant 0 : i32
    %c0_i32_0 = arith.constant 0 : i32
    %c0_i32_1 = arith.constant 0 : i32
    return %c0_i32, %c0_i32_0 : i32, i32
  }
  func.func @transform_2(%arg0: i32) -> (i32, i32, i32) {
    %c1_i32 = arith.constant 1 : i32
    %0 = arith.subi %arg0, %c1_i32 : i32
    %c0_i32 = arith.constant 0 : i32
    %1 = arith.maxsi %0, %c0_i32 : i32
    %c0_i32_0 = arith.constant 0 : i32
    %c0_i32_1 = arith.constant 0 : i32
    %c0_i32_2 = arith.constant 0 : i32
    return %1, %c0_i32_0, %c0_i32_1 : i32, i32, i32
  }
  func.func @transform_3(%arg0: i32) -> (i32, i32, i32) {
    %c0_i32 = arith.constant 0 : i32
    %c0_i32_0 = arith.constant 0 : i32
    %c0_i32_1 = arith.constant 0 : i32
    return %arg0, %c0_i32, %c0_i32_0 : i32, i32, i32
  }
  func.func @transform_4(%arg0: i32) -> (i32, i32, i32) {
    %c0_i32 = arith.constant 0 : i32
    %c0_i32_0 = arith.constant 0 : i32
    %c0_i32_1 = arith.constant 0 : i32
    return %arg0, %c0_i32, %c0_i32_0 : i32, i32, i32
  }
  func.func @transform_5(%arg0: i32) -> (i32, i32, i32) {
    %c0_i32 = arith.constant 0 : i32
    %c0_i32_0 = arith.constant 0 : i32
    %c0_i32_1 = arith.constant 0 : i32
    return %arg0, %c0_i32, %c0_i32_0 : i32, i32, i32
  }
  func.func @transform_6(%arg0: i32) -> (i32, i32, i32) {
    %c0_i32 = arith.constant 0 : i32
    %c0_i32_0 = arith.constant 0 : i32
    %c0_i32_1 = arith.constant 0 : i32
    return %arg0, %c0_i32, %c0_i32_0 : i32, i32, i32
  }
  func.func @transform_7(%arg0: i32) -> (i32, i32) {
    %c0_i32 = arith.constant 0 : i32
    %c0_i32_0 = arith.constant 0 : i32
    %c0_i32_1 = arith.constant 0 : i32
    return %c0_i32, %c0_i32_0 : i32, i32
  }
  func.func @transform_8(%arg0: i32) -> (i32, i32) {
    %c0_i32 = arith.constant 0 : i32
    %c0_i32_0 = arith.constant 0 : i32
    %c0_i32_1 = arith.constant 0 : i32
    return %c0_i32, %c0_i32_0 : i32, i32
  }
  func.func @transform_9(%arg0: i32) -> (i32, i32) {
    %c0_i32 = arith.constant 0 : i32
    %c0_i32_0 = arith.constant 0 : i32
    %c0_i32_1 = arith.constant 0 : i32
    return %c0_i32, %c0_i32_0 : i32, i32
  }
  func.func @transform_10(%arg0: i32) -> (i32, i32, i32) {
    %c0_i32 = arith.constant 0 : i32
    %c0_i32_0 = arith.constant 0 : i32
    %c0_i32_1 = arith.constant 0 : i32
    return %arg0, %c0_i32, %c0_i32_0 : i32, i32, i32
  }
  func.func @transform_11(%arg0: i32) -> (i32, i32, i32) {
    %c0_i32 = arith.constant 0 : i32
    %c0_i32_0 = arith.constant 0 : i32
    %c0_i32_1 = arith.constant 0 : i32
    return %arg0, %c0_i32, %c0_i32_0 : i32, i32, i32
  }
}

</mosaic_0001>

<llo_original>
// kernel: lstm_demo_forward.1
$region0: #{lstm_demo_forward.1}
  #allocation0 [shape = 'u32[]', space=smem, size = 0x4, offset = 0x4, fixed_abs, tag = 'smem constant byte address 0x4 - core index']
  #allocation1 [shape = 'u32[144,128]{1,0:T(1,128)}', space=vmem, size = 0x12000, scoped, tag = 'internal scratch']
  #allocation2 [shape = 'f32[64,32]{1,0:T(8,128)}', space=vmem, size = 0x8000, scoped, tag = 'scratch operand']
  #allocation3 [shape = 'f32[64,128]{1,0:T(8,128)}', space=vmem, size = 0x8000, scoped, tag = 'scratch operand']
  %s0 = inlined_call_operand.vmem [shape: bf16[64,32], index: 0, kind: input, shape index: {}]
  %s1 = inlined_call_operand.vmem [shape: bf16[32,128], index: 1, kind: input, shape index: {}]
  %s2 = inlined_call_operand.vmem [shape: bf16[1,32,128], index: 2, kind: input, shape index: {}]
  %s3 = inlined_call_operand.vmem [shape: bf16[2,32,128], index: 3, kind: input, shape index: {}]
  %s4 = inlined_call_operand.vmem [shape: f32[2,1,128], index: 4, kind: input, shape index: {}]
  %s5 = inlined_call_operand.vmem [shape: f32[2,8,32], index: 5, kind: input, shape index: {}, may-alias: {5,6}]
  %s6 = inlined_call_operand.vmem [shape: f32[2,8,32], index: 6, kind: input, shape index: {}, may-alias: {5,6}]
  %s7 = inlined_call_operand.vmem [shape: bf16[32,128], index: 7, kind: input, shape index: {}]
  %s8 = inlined_call_operand.vmem [shape: f32[1,128], index: 8, kind: input, shape index: {}]
  %s9 = inlined_call_operand.vmem [shape: f32[64,128], index: 9, kind: output, shape index: {0}]
  %s10 = inlined_call_operand.vmem [shape: f32[2,8,32], index: 10, kind: output, shape index: {1}]
  %s11 = inlined_call_operand.vmem [shape: f32[2,8,32], index: 11, kind: output, shape index: {2}]
  %12 = xla_tuple %s9, %s10, %s11
  %s13 = sld [smem:[#allocation0]]
  $region97: #{lstm_demo_forward.1} parent=0
    _
  %s15 = ssub.s32 1, %s13
  %s16 = scalar_select 0, %s15, %s13
  loop: start=0, step=1, limit=4
  $region2: #{lstm_demo_forward.1} parent=0 // loop_pre_header
    _
  $region3: #{lstm_demo_forward.1} parent=0 // loop_header
    %s18 = sphi 0, %s22
    %p19 = scmp.ge.s32.totalorder %s18, 4
    %s26 = sphi 0, %s26
    %s28 = sphi 0, %s26
    %s29 = sphi 0, %s28
    %s43 = sphi 0, %s29
    %s47 = sphi 0, %s47
    %s49 = sphi 0, %s47
    %s50 = sphi 0, %s49
    %s64 = sphi 0, %s50
    %s76 = sphi 0, %s78
    %s79 = sphi 0, %s76
    %s80 = sphi 0, %s79
    %s96 = sphi 0, %s80
    %s102 = sphi 0, %s104
    %s105 = sphi 0, %s102
    %s106 = sphi 0, %s105
    %s122 = sphi 0, %s106
    %s128 = sphi 0, %s130
    %s131 = sphi 0, %s128
    %s132 = sphi 0, %s131
    %s148 = sphi 0, %s132
    %s154 = sphi 0, %s156
    %s157 = sphi 0, %s154
    %s158 = sphi 0, %s157
    %s174 = sphi 0, %s158
    %s180 = sphi 0, %s182
    %s183 = sphi 0, %s180
    %s184 = sphi 0, %s183
    %s200 = sphi 0, %s184
    %s204 = sphi 0, %s204
    %s206 = sphi 0, %s204
    %s207 = sphi 0, %s206
    %s221 = sphi 0, %s207
    %s225 = sphi 0, %s225
    %s227 = sphi 0, %s225
    %s228 = sphi 0, %s227
    %s242 = sphi 0, %s228
    %s246 = sphi 0, %s246
    %s248 = sphi 0, %s246
    %s249 = sphi 0, %s248
    %s263 = sphi 0, %s249
    %s269 = sphi 0, %s271
    %s272 = sphi 0, %s269
    %s273 = sphi 0, %s272
    %s289 = sphi 0, %s273
    %s295 = sphi 0, %s297
    %s298 = sphi 0, %s295
    %s299 = sphi 0, %s298
    %s315 = sphi 0, %s299
  $region4: #{lstm_demo_forward.1} parent=0 // loop_header_branch
    %21 = sbr.rel (%p19) target = $region8
  $region5: #{lstm_demo_forward.1} parent=0 // loop_body
    %s23 = ssub.s32 %s18, 1
    %s24 = ssub.s32 %s18, 2
    %s25 = sadd.s32 %s18, 1
    %s27 = sadd.s32 %s26, 1
    %p30 = scmp.eq.s32.totalorder %s18, 1
    %p31 = scmp.ne.s32.totalorder %s26, %s28
    %p32 = scmp.eq.s32.totalorder %s18, 0
    %p33 = por %p31, %p32
    %p34 = scmp.ne.s32.totalorder %s26, %s28
    %p35 = scmp.eq.s32.totalorder %s23, 1
    %p36 = por %p34, %p35
    %p37 = scmp.ne.s32.totalorder %s28, %s29
    %p38 = scmp.eq.s32.totalorder %s23, 0
    %p39 = por %p37, %p38
    %p40 = scmp.ne.s32.totalorder %s28, %s29
    %p41 = scmp.eq.s32.totalorder %s24, 1
    %p42 = por %p40, %p41
    %p44 = scmp.ne.s32.totalorder %s29, %s43
    %p45 = scmp.eq.s32.totalorder %s24, 0
    %p46 = por %p44, %p45
    %s48 = sadd.s32 %s47, 1
    %p51 = scmp.eq.s32.totalorder %s18, 1
    %p52 = scmp.ne.s32.totalorder %s47, %s49
    %p53 = scmp.eq.s32.totalorder %s18, 0
    %p54 = por %p52, %p53
    %p55 = scmp.ne.s32.totalorder %s47, %s49
    %p56 = scmp.eq.s32.totalorder %s23, 1
    %p57 = por %p55, %p56
    %p58 = scmp.ne.s32.totalorder %s49, %s50
    %p59 = scmp.eq.s32.totalorder %s23, 0
    %p60 = por %p58, %p59
    %p61 = scmp.ne.s32.totalorder %s49, %s50
    %p62 = scmp.eq.s32.totalorder %s24, 1
    %p63 = por %p61, %p62
    %p65 = scmp.ne.s32.totalorder %s50, %s64
    %p66 = scmp.eq.s32.totalorder %s24, 0
    %p67 = por %p65, %p66
    %s68 = ssub.s32 %s18, 1
    %p69 = scmp.gt.s32.totalorder %s68, 0
    %s70 = scalar_select %p69, %s68, 0
    %s71 = ssub.s32 %s25, 1
    %p72 = scmp.gt.s32.totalorder %s71, 0
    %s73 = scalar_select %p72, %s71, 0
    %s74 = ssub.s32 %s70, %s73
    %p75 = scmp.eq.s32.totalorder %s74, 0
    %s77 = sadd.s32 %s76, 1
    %s78 = scalar_select %p75, %s76, %s77
    %p81 = pneg %p75
    %p82 = scmp.eq.s32.totalorder %s18, 1
    %p83 = por %p81, %p82
    %p84 = scmp.ne.s32.totalorder %s76, %s79
    %p85 = scmp.eq.s32.totalorder %s18, 0
    %p86 = por %p84, %p85
    %p87 = scmp.ne.s32.totalorder %s76, %s79
    %p88 = scmp.eq.s32.totalorder %s23, 1
    %p89 = por %p87, %p88
    %p90 = scmp.ne.s32.totalorder %s79, %s80
    %p91 = scmp.eq.s32.totalorder %s23, 0
    %p92 = por %p90, %p91
    %p93 = scmp.ne.s32.totalorder %s79, %s80
    %p94 = scmp.eq.s32.totalorder %s24, 1
    %p95 = por %p93, %p94
    %p97 = scmp.ne.s32.totalorder %s80, %s96
    %p98 = scmp.eq.s32.totalorder %s24, 0
    %p99 = por %p97, %p98
    %s100 = ssub.s32 %s18, %s25
    %p101 = scmp.eq.s32.totalorder %s100, 0
    %s103 = sadd.s32 %s102, 1
    %s104 = scalar_select %p101, %s102, %s103
    %p107 = pneg %p101
    %p108 = scmp.eq.s32.totalorder %s18, 1
    %p109 = por %p107, %p108
    %p110 = scmp.ne.s32.totalorder %s102, %s105
    %p111 = scmp.eq.s32.totalorder %s18, 0
    %p112 = por %p110, %p111
    %p113 = scmp.ne.s32.totalorder %s102, %s105
    %p114 = scmp.eq.s32.totalorder %s23, 1
    %p115 = por %p113, %p114
    %p116 = scmp.ne.s32.totalorder %s105, %s106
    %p117 = scmp.eq.s32.totalorder %s23, 0
    %p118 = por %p116, %p117
    %p119 = scmp.ne.s32.totalorder %s105, %s106
    %p120 = scmp.eq.s32.totalorder %s24, 1
    %p121 = por %p119, %p120
    %p123 = scmp.ne.s32.totalorder %s106, %s122
    %p124 = scmp.eq.s32.totalorder %s24, 0
    %p125 = por %p123, %p124
    %s126 = ssub.s32 %s18, %s25
    %p127 = scmp.eq.s32.totalorder %s126, 0
    %s129 = sadd.s32 %s128, 1
    %s130 = scalar_select %p127, %s128, %s129
    %p133 = pneg %p127
    %p134 = scmp.eq.s32.totalorder %s18, 1
    %p135 = por %p133, %p134
    %p136 = scmp.ne.s32.totalorder %s128, %s131
    %p137 = scmp.eq.s32.totalorder %s18, 0
    %p138 = por %p136, %p137
    %p139 = scmp.ne.s32.totalorder %s128, %s131
    %p140 = scmp.eq.s32.totalorder %s23, 1
    %p141 = por %p139, %p140
    %p142 = scmp.ne.s32.totalorder %s131, %s132
    %p143 = scmp.eq.s32.totalorder %s23, 0
    %p144 = por %p142, %p143
    %p145 = scmp.ne.s32.totalorder %s131, %s132
    %p146 = scmp.eq.s32.totalorder %s24, 1
    %p147 = por %p145, %p146
    %p149 = scmp.ne.s32.totalorder %s132, %s148
    %p150 = scmp.eq.s32.totalorder %s24, 0
    %p151 = por %p149, %p150
    %s152 = ssub.s32 %s18, %s25
    %p153 = scmp.eq.s32.totalorder %s152, 0
    %s155 = sadd.s32 %s154, 1
    %s156 = scalar_select %p153, %s154, %s155
    %p159 = pneg %p153
    %p160 = scmp.eq.s32.totalorder %s18, 1
    %p161 = por %p159, %p160
    %p162 = scmp.ne.s32.totalorder %s154, %s157
    %p163 = scmp.eq.s32.totalorder %s18, 0
    %p164 = por %p162, %p163
    %p165 = scmp.ne.s32.totalorder %s154, %s157
    %p166 = scmp.eq.s32.totalorder %s23, 1
    %p167 = por %p165, %p166
    %p168 = scmp.ne.s32.totalorder %s157, %s158
    %p169 = scmp.eq.s32.totalorder %s23, 0
    %p170 = por %p168, %p169
    %p171 = scmp.ne.s32.totalorder %s157, %s158
    %p172 = scmp.eq.s32.totalorder %s24, 1
    %p173 = por %p171, %p172
    %p175 = scmp.ne.s32.totalorder %s158, %s174
    %p176 = scmp.eq.s32.totalorder %s24, 0
    %p177 = por %p175, %p176
    %s178 = ssub.s32 %s18, %s25
    %p179 = scmp.eq.s32.totalorder %s178, 0
    %s181 = sadd.s32 %s180, 1
    %s182 = scalar_select %p179, %s180, %s181
    %p185 = pneg %p179
    %p186 = scmp.eq.s32.totalorder %s18, 1
    %p187 = por %p185, %p186
    %p188 = scmp.ne.s32.totalorder %s180, %s183
    %p189 = scmp.eq.s32.totalorder %s18, 0
    %p190 = por %p188, %p189
    %p191 = scmp.ne.s32.totalorder %s180, %s183
    %p192 = scmp.eq.s32.totalorder %s23, 1
    %p193 = por %p191, %p192
    %p194 = scmp.ne.s32.totalorder %s183, %s184
    %p195 = scmp.eq.s32.totalorder %s23, 0
    %p196 = por %p194, %p195
    %p197 = scmp.ne.s32.totalorder %s183, %s184
    %p198 = scmp.eq.s32.totalorder %s24, 1
    %p199 = por %p197, %p198
    %p201 = scmp.ne.s32.totalorder %s184, %s200
    %p202 = scmp.eq.s32.totalorder %s24, 0
    %p203 = por %p201, %p202
    %s205 = sadd.s32 %s204, 1
    %p208 = scmp.eq.s32.totalorder %s18, 1
    %p209 = scmp.ne.s32.totalorder %s204, %s206
    %p210 = scmp.eq.s32.totalorder %s18, 0
    %p211 = por %p209, %p210
    %p212 = scmp.ne.s32.totalorder %s204, %s206
    %p213 = scmp.eq.s32.totalorder %s23, 1
    %p214 = por %p212, %p213
    %p215 = scmp.ne.s32.totalorder %s206, %s207
    %p216 = scmp.eq.s32.totalorder %s23, 0
    %p217 = por %p215, %p216
    %p218 = scmp.ne.s32.totalorder %s206, %s207
    %p219 = scmp.eq.s32.totalorder %s24, 1
    %p220 = por %p218, %p219
    %p222 = scmp.ne.s32.totalorder %s207, %s221
    %p223 = scmp.eq.s32.totalorder %s24, 0
    %p224 = por %p222, %p223
    %s226 = sadd.s32 %s225, 1
    %p229 = scmp.eq.s32.totalorder %s18, 1
    %p230 = scmp.ne.s32.totalorder %s225, %s227
    %p231 = scmp.eq.s32.totalorder %s18, 0
    %p232 = por %p230, %p231
    %p233 = scmp.ne.s32.totalorder %s225, %s227
    %p234 = scmp.eq.s32.totalorder %s23, 1
    %p235 = por %p233, %p234
    %p236 = scmp.ne.s32.totalorder %s227, %s228
    %p237 = scmp.eq.s32.totalorder %s23, 0
    %p238 = por %p236, %p237
    %p239 = scmp.ne.s32.totalorder %s227, %s228
    %p240 = scmp.eq.s32.totalorder %s24, 1
    %p241 = por %p239, %p240
    %p243 = scmp.ne.s32.totalorder %s228, %s242
    %p244 = scmp.eq.s32.totalorder %s24, 0
    %p245 = por %p243, %p244
    %s247 = sadd.s32 %s246, 1
    %p250 = scmp.eq.s32.totalorder %s18, 1
    %p251 = scmp.ne.s32.totalorder %s246, %s248
    %p252 = scmp.eq.s32.totalorder %s18, 0
    %p253 = por %p251, %p252
    %p254 = scmp.ne.s32.totalorder %s246, %s248
    %p255 = scmp.eq.s32.totalorder %s23, 1
    %p256 = por %p254, %p255
    %p257 = scmp.ne.s32.totalorder %s248, %s249
    %p258 = scmp.eq.s32.totalorder %s23, 0
    %p259 = por %p257, %p258
    %p260 = scmp.ne.s32.totalorder %s248, %s249
    %p261 = scmp.eq.s32.totalorder %s24, 1
    %p262 = por %p260, %p261
    %p264 = scmp.ne.s32.totalorder %s249, %s263
    %p265 = scmp.eq.s32.totalorder %s24, 0
    %p266 = por %p264, %p265
    %s267 = ssub.s32 %s18, %s25
    %p268 = scmp.eq.s32.totalorder %s267, 0
    %s270 = sadd.s32 %s269, 1
    %s271 = scalar_select %p268, %s269, %s270
    %p274 = pneg %p268
    %p275 = scmp.eq.s32.totalorder %s18, 1
    %p276 = por %p274, %p275
    %p277 = scmp.ne.s32.totalorder %s269, %s272
    %p278 = scmp.eq.s32.totalorder %s18, 0
    %p279 = por %p277, %p278
    %p280 = scmp.ne.s32.totalorder %s269, %s272
    %p281 = scmp.eq.s32.totalorder %s23, 1
    %p282 = por %p280, %p281
    %p283 = scmp.ne.s32.totalorder %s272, %s273
    %p284 = scmp.eq.s32.totalorder %s23, 0
    %p285 = por %p283, %p284
    %p286 = scmp.ne.s32.totalorder %s272, %s273
    %p287 = scmp.eq.s32.totalorder %s24, 1
    %p288 = por %p286, %p287
    %p290 = scmp.ne.s32.totalorder %s273, %s289
    %p291 = scmp.eq.s32.totalorder %s24, 0
    %p292 = por %p290, %p291
    %s293 = ssub.s32 %s18, %s25
    %p294 = scmp.eq.s32.totalorder %s293, 0
    %s296 = sadd.s32 %s295, 1
    %s297 = scalar_select %p294, %s295, %s296
    %p300 = pneg %p294
    %p301 = scmp.eq.s32.totalorder %s18, 1
    %p302 = por %p300, %p301
    %p303 = scmp.ne.s32.totalorder %s295, %s298
    %p304 = scmp.eq.s32.totalorder %s18, 0
    %p305 = por %p303, %p304
    %p306 = scmp.ne.s32.totalorder %s295, %s298
    %p307 = scmp.eq.s32.totalorder %s23, 1
    %p308 = por %p306, %p307
    %p309 = scmp.ne.s32.totalorder %s298, %s299
    %p310 = scmp.eq.s32.totalorder %s23, 0
    %p311 = por %p309, %p310
    %p312 = scmp.ne.s32.totalorder %s298, %s299
    %p313 = scmp.eq.s32.totalorder %s24, 1
    %p314 = por %p312, %p313
    %p316 = scmp.ne.s32.totalorder %s299, %s315
    %p317 = scmp.eq.s32.totalorder %s24, 0
    %p318 = por %p316, %p317
    %p319 = scmp.le.s32.totalorder 1, %s18
    %p320 = scmp.lt.s32.totalorder %s18, 3
    %p321 = pnand %p319, %p320
    %p322 = pneg %p321
    // Predicated region
    $region9: #{lstm_demo_forward.1} parent=5 // pred_check
      _
    $region10: #{lstm_demo_forward.1} parent=5 // pred_check_branch
      %324 = sbr.rel (%p321) target = $region12
    $region11: #{lstm_demo_forward.1} parent=5 // pred_region
      %s325 = ssub.s32 %s18, 1
      // Predicated region
      $region13: #{lstm_demo_forward.1} parent=11 // pred_check
        %p326 = pneg %p39
      $region14: #{lstm_demo_forward.1} parent=11 // pred_check_branch
        %328 = sbr.rel (%p326) target = $region16
      $region15: #{lstm_demo_forward.1} parent=11 // pred_region
        _
      $region16: #{lstm_demo_forward.1} parent=11 // pred_fallthru
        _
      // Predicated region
      $region17: #{lstm_demo_forward.1} parent=11 // pred_check
        %p329 = pneg %p60
      $region18: #{lstm_demo_forward.1} parent=11 // pred_check_branch
        %331 = sbr.rel (%p329) target = $region20
      $region19: #{lstm_demo_forward.1} parent=11 // pred_region
        _
      $region20: #{lstm_demo_forward.1} parent=11 // pred_fallthru
        _
      // Predicated region
      $region21: #{lstm_demo_forward.1} parent=11 // pred_check
        %p332 = pneg %p217
      $region22: #{lstm_demo_forward.1} parent=11 // pred_check_branch
        %334 = sbr.rel (%p332) target = $region24
      $region23: #{lstm_demo_forward.1} parent=11 // pred_region
        _
      $region24: #{lstm_demo_forward.1} parent=11 // pred_fallthru
        _
      // Predicated region
      $region25: #{lstm_demo_forward.1} parent=11 // pred_check
        %p335 = pneg %p238
      $region26: #{lstm_demo_forward.1} parent=11 // pred_check_branch
        %337 = sbr.rel (%p335) target = $region28
      $region27: #{lstm_demo_forward.1} parent=11 // pred_region
        _
      $region28: #{lstm_demo_forward.1} parent=11 // pred_fallthru
        _
    $region12: #{lstm_demo_forward.1} parent=5 // pred_fallthru
      _
    %p338 = scmp.lt.s32.totalorder %s18, 2
    // Predicated region
    $region29: #{lstm_demo_forward.1} parent=5 // pred_check
      %p339 = pneg %p338
    $region30: #{lstm_demo_forward.1} parent=5 // pred_check_branch
      %341 = sbr.rel (%p339) target = $region32
    $region31: #{lstm_demo_forward.1} parent=5 // pred_region
      // Predicated region
      $region33: #{lstm_demo_forward.1} parent=31 // pred_check
        %p342 = pneg %p86
      $region34: #{lstm_demo_forward.1} parent=31 // pred_check_branch
        %344 = sbr.rel (%p342) target = $region36
      $region35: #{lstm_demo_forward.1} parent=31 // pred_region
        %s345 = ssub.s32 %s18, 1
        %p346 = scmp.gt.s32.totalorder %s345, 0
        %s347 = scalar_select %p346, %s345, 0
        %p348 = scmp.lt.s32.totalorder %s347, 0
        %s349 = scalar_select %p348, %s347, 0
        %s350 = smul.addr %s349, 4
        %s351 = smul.addr %s350, 4
        %s352 = scalar_lea.vmem %s2, %s351
        %s353 = ssub.s32 %s18, 1
        %p354 = scmp.gt.s32.totalorder %s353, 0
        %s355 = scalar_select %p354, %s353, 0
      $region36: #{lstm_demo_forward.1} parent=31 // pred_fallthru
        _
      // Predicated region
      $region37: #{lstm_demo_forward.1} parent=31 // pred_check
        %p356 = pneg %p112
      $region38: #{lstm_demo_forward.1} parent=31 // pred_check_branch
        %358 = sbr.rel (%p356) target = $region40
      $region39: #{lstm_demo_forward.1} parent=31 // pred_region
        %p359 = scmp.lt.s32.totalorder %s18, 1
        %s360 = scalar_select %p359, %s18, 1
        %s361 = smul.addr %s360, 4
        %s362 = smul.addr %s361, 4
        %s363 = scalar_lea.vmem %s3, %s362
      $region40: #{lstm_demo_forward.1} parent=31 // pred_fallthru
        _
      // Predicated region
      $region41: #{lstm_demo_forward.1} parent=31 // pred_check
        %p364 = pneg %p138
      $region42: #{lstm_demo_forward.1} parent=31 // pred_check_branch
        %366 = sbr.rel (%p364) target = $region44
      $region43: #{lstm_demo_forward.1} parent=31 // pred_region
        %p367 = scmp.lt.s32.totalorder %s18, 1
        %s368 = scalar_select %p367, %s18, 1
        %s369 = scalar_lea.vmem %s4, %s368
      $region44: #{lstm_demo_forward.1} parent=31 // pred_fallthru
        _
      // Predicated region
      $region45: #{lstm_demo_forward.1} parent=31 // pred_check
        %p370 = pneg %p164
      $region46: #{lstm_demo_forward.1} parent=31 // pred_check_branch
        %372 = sbr.rel (%p370) target = $region48
      $region47: #{lstm_demo_forward.1} parent=31 // pred_region
        %p373 = scmp.lt.s32.totalorder %s18, 1
        %s374 = scalar_select %p373, %s18, 1
        %s375 = smul.addr %s374, 8
        %s376 = scalar_lea.vmem %s5, %s375
      $region48: #{lstm_demo_forward.1} parent=31 // pred_fallthru
        _
      // Predicated region
      $region49: #{lstm_demo_forward.1} parent=31 // pred_check
        %p377 = pneg %p190
      $region50: #{lstm_demo_forward.1} parent=31 // pred_check_branch
        %379 = sbr.rel (%p377) target = $region52
      $region51: #{lstm_demo_forward.1} parent=31 // pred_region
        %p380 = scmp.lt.s32.totalorder %s18, 1
        %s381 = scalar_select %p380, %s18, 1
        %s382 = smul.addr %s381, 8
        %s383 = scalar_lea.vmem %s6, %s382
      $region52: #{lstm_demo_forward.1} parent=31 // pred_fallthru
        _
    $region32: #{lstm_demo_forward.1} parent=5 // pred_fallthru
      _
    %p384 = scmp.le.s32.totalorder 1, %s18
    %p385 = scmp.lt.s32.totalorder %s18, 3
    %p386 = pnand %p384, %p385
    %p387 = pneg %p386
    // Predicated region
    $region53: #{lstm_demo_forward.1} parent=5 // pred_check
      _
    $region54: #{lstm_demo_forward.1} parent=5 // pred_check_branch
      %389 = sbr.rel (%p386) target = $region56
    $region55: #{lstm_demo_forward.1} parent=5 // pred_region
      %s390 = ssub.s32 %s18, 1
      %p391 = pneg %p39
      %p392 = pneg %p36
      %p393 = pneg %p60
      %p394 = pneg %p57
      %s395 = ssub.s32 %s23, 1
      %p396 = scmp.gt.s32.totalorder %s395, 0
      %s397 = scalar_select %p396, %s395, 0
      %p398 = scmp.lt.s32.totalorder %s397, 0
      %s399 = scalar_select %p398, %s397, 0
      %s400 = smul.addr %s399, 4
      %s401 = smul.addr %s400, 4
      %s402 = scalar_lea.vmem %s2, %s401
      %p403 = pneg %p92
      %p404 = pneg %p89
      %p405 = scmp.lt.s32.totalorder %s23, 1
      %s406 = scalar_select %p405, %s23, 1
      %s407 = smul.addr %s406, 4
      %s408 = smul.addr %s407, 4
      %s409 = scalar_lea.vmem %s3, %s408
      %p410 = pneg %p118
      %p411 = pneg %p115
      %p412 = scmp.lt.s32.totalorder %s23, 1
      %s413 = scalar_select %p412, %s23, 1
      %s414 = scalar_lea.vmem %s4, %s413
      %p415 = pneg %p144
      %p416 = pneg %p141
      %p417 = scmp.lt.s32.totalorder %s23, 1
      %s418 = scalar_select %p417, %s23, 1
      %s419 = smul.addr %s418, 8
      %s420 = scalar_lea.vmem %s5, %s419
      %p421 = pneg %p170
      %p422 = pneg %p167
      %p423 = scmp.lt.s32.totalorder %s23, 1
      %s424 = scalar_select %p423, %s23, 1
      %s425 = smul.addr %s424, 8
      %s426 = scalar_lea.vmem %s6, %s425
      %p427 = pneg %p196
      %p428 = pneg %p193
      %p429 = pneg %p217
      %p430 = pneg %p214
      %p431 = pneg %p238
      %p432 = pneg %p235
      %p433 = pneg %p259
      %p434 = pneg %p256
      %p435 = pneg %p285
      %p436 = pneg %p282
      %p437 = scmp.lt.s32.totalorder %s23, 1
      %s438 = scalar_select %p437, %s23, 1
      %s439 = smul.addr %s438, 8
      %s440 = scalar_lea.vmem %s10, %s439
      %p441 = pneg %p311
      %p442 = pneg %p308
      %p443 = scmp.lt.s32.totalorder %s23, 1
      %s444 = scalar_select %p443, %s23, 1
      %s445 = smul.addr %s444, 8
      %s446 = scalar_lea.vmem %s11, %s445
      %s447 = ssub.s32 %s23, 1
      %p448 = scmp.gt.s32.totalorder %s447, 0
      %s449 = scalar_select %p448, %s447, 0
      %p450 = scmp.lt.s32.totalorder %s449, 0
      %s451 = scalar_select %p450, %s449, 0
      %s452 = smul.addr %s451, 4
      %s453 = smul.addr %s452, 4
      %s454 = scalar_lea.vmem %s2, %s453
      %s455 = ssub.s32 %s23, 1
      %p456 = scmp.gt.s32.totalorder %s455, 0
      %s457 = scalar_select %p456, %s455, 0
      %p458 = scmp.lt.s32.totalorder %s23, 1
      %s459 = scalar_select %p458, %s23, 1
      %s460 = smul.addr %s459, 4
      %s461 = smul.addr %s460, 4
      %s462 = scalar_lea.vmem %s3, %s461
      %p463 = scmp.lt.s32.totalorder %s23, 1
      %s464 = scalar_select %p463, %s23, 1
      %s465 = scalar_lea.vmem %s4, %s464
      %p466 = scmp.lt.s32.totalorder %s23, 1
      %s467 = scalar_select %p466, %s23, 1
      %s468 = smul.addr %s467, 8
      %s469 = scalar_lea.vmem %s5, %s468
      %p470 = scmp.lt.s32.totalorder %s23, 1
      %s471 = scalar_select %p470, %s23, 1
      %s472 = smul.addr %s471, 8
      %s473 = scalar_lea.vmem %s6, %s472
      %p474 = scmp.lt.s32.totalorder %s23, 1
      %s475 = scalar_select %p474, %s23, 1
      %s476 = smul.addr %s475, 8
      %s477 = scalar_lea.vmem %s10, %s476
      %p478 = scmp.lt.s32.totalorder %s23, 1
      %s479 = scalar_select %p478, %s23, 1
      %s480 = smul.addr %s479, 8
      %s481 = scalar_lea.vmem %s11, %s480
      %v483 = vld [vmem:[%s465] sm:$0x1]
      %p484 = scmp.eq.s32.totalorder %s23, 0
      // Predicated region
      $region57: #{lstm_demo_forward.1} parent=55 // pred_check
        %p485 = pneg %p484
      $region58: #{lstm_demo_forward.1} parent=55 // pred_check_branch
        %487 = sbr.rel (%p485) target = $region60
      $region59: #{lstm_demo_forward.1} parent=55 // pred_region
        %v488 = vld [vmem:[%s0] sm:$0xf]
        %v489 = vld [vmem:[%s0 + $0x4] sm:$0xf]
        %v490 = vld [vmem:[%s0 + $0x8] sm:$0xf]
        %v491 = vld [vmem:[%s0 + $0xc] sm:$0xf]
        %v492 = vld [vmem:[%s0 + $0x10] sm:$0xf]
        %v493 = vld [vmem:[%s0 + $0x14] sm:$0xf]
        %v494 = vld [vmem:[%s0 + $0x18] sm:$0xf]
        %v495 = vld [vmem:[%s0 + $0x1c] sm:$0xf]
        %v496 = vld [vmem:[%s1] sm:$0xf]
        %v497 = vld [vmem:[%s1 + $0x4] sm:$0xf]
        %v498 = vld [vmem:[%s1 + $0x8] sm:$0xf]
        %v499 = vld [vmem:[%s1 + $0xc] sm:$0xf]
        %v501 = vlaneseq
        %v502 = vshrl.u32 %v501, 7
        %v503 = vsub.s32 0, %v502
        %v504 = vrot.slane %v483, %v503
        %v514 = vunpack.c.l.b16 %v488
        %v515 = vunpack.c.l.b16 %v489
        %v516 = vunpack.c.l.b16 %v490
        %v517 = vunpack.c.l.b16 %v491
        %v518 = vunpack.c.l.b16 %v492
        %v519 = vunpack.c.l.b16 %v493
        %v520 = vunpack.c.l.b16 %v494
        %v521 = vunpack.c.l.b16 %v495
        %v522 = vpack.c.b16 %v515, %v514
        %v523 = vpack.c.b16 %v517, %v516
        %v524 = vpack.c.b16 %v519, %v518
        %v525 = vpack.c.b16 %v521, %v520
        %v530 = vunpack.c.l.b16 %v496
        %v531 = vunpack.c.l.b16 %v497
        %v532 = vunpack.c.l.b16 %v498
        %v533 = vunpack.c.l.b16 %v499
        %v534 = vpack.c.b16 %v531, %v530
        %v535 = vpack.c.b16 %v533, %v532
        %vm538 = vcmask 261120
        %v540 = vsel %vm538, %v522, 0
        %v543 = vsel %vm538, %v523, 0
        %v546 = vsel %vm538, %v524, 0
        %v549 = vsel %vm538, %v525, 0
        %551 = vmatprep.subr.bf16.mxu0 0
        %552 = vmatpush1.bf16.msra.mxu0 0
        %553 = vmatprep.subr.bf16.mxu0 0
        %554 = vmatpush1.bf16.msra.mxu0 0
        %555 = vmatprep.subr.bf16.mxu0 0
        %556 = vmatpush1.bf16.msra.mxu0 0
        %557 = vmatprep.subr.bf16.mxu0 0
        %558 = vmatpush1.bf16.msra.mxu0 0
        %559 = vmatprep.subr.bf16.mxu0 0
        %560 = vmatpush1.bf16.msra.mxu0 0
        %561 = vmatprep.subr.bf16.mxu0 0
        %562 = vmatpush1.bf16.msra.mxu0 0
        %563 = vmatprep.subr.bf16.mxu0 0
        %564 = vmatpush1.bf16.msra.mxu0 %v535
        %565 = vmatprep.subr.bf16.mxu0 0
        %566 = vmatpush1.bf16.msra.mxu0 %v534
        %567 = vmatprep.subr.bf16.mxu0 0
        %568 = vmatpush2.bf16.msra.mxu0 0
        %569 = vmatprep.subr.bf16.mxu0 0
        %570 = vmatpush2.bf16.msra.mxu0 0
        %571 = vmatprep.subr.bf16.mxu0 0
        %572 = vmatpush2.bf16.msra.mxu0 0
        %573 = vmatprep.subr.bf16.mxu0 0
        %574 = vmatpush2.bf16.msra.mxu0 0
        %575 = vmatprep.subr.bf16.mxu0 0
        %576 = vmatpush2.bf16.msra.mxu0 0
        %577 = vmatprep.subr.bf16.mxu0 0
        %578 = vmatpush2.bf16.msra.mxu0 0
        %579 = vmatprep.subr.bf16.mxu0 0
        %580 = vmatpush2.bf16.msra.mxu0 0
        %581 = vmatprep.subr.bf16.mxu0 0
        %582 = vmatpush2.bf16.msra.mxu0 0
        %583 = vmatprep.mubr.bf16.mxu0 0
        %584 = vmatmul.mubr.bf16.gmra.mxu0 %v540
        %v585 = vpop.f32.mrf.mxu0
        %v586 = vadd.f32 %v504, %v585
        %v587 = vpop.f32.mrf.mxu0
        %v588 = vpop.f32.mrf.mxu0
        %v589 = vadd.f32 %v504, %v588
        %v590 = vpop.f32.mrf.mxu0
        %591 = vmatprep.mubr.bf16.mxu0 0
        %592 = vmatmul.mubr.bf16.gmra.mxu0 %v543
        %v593 = vpop.f32.mrf.mxu0
        %v594 = vadd.f32 %v504, %v593
        %v595 = vpop.f32.mrf.mxu0
        %v596 = vpop.f32.mrf.mxu0
        %v597 = vadd.f32 %v504, %v596
        %v598 = vpop.f32.mrf.mxu0
        %599 = vmatprep.mubr.bf16.mxu0 0
        %600 = vmatmul.mubr.bf16.gmra.mxu0 %v546
        %v601 = vpop.f32.mrf.mxu0
        %v602 = vadd.f32 %v504, %v601
        %v603 = vpop.f32.mrf.mxu0
        %v604 = vpop.f32.mrf.mxu0
        %v605 = vadd.f32 %v504, %v604
        %v606 = vpop.f32.mrf.mxu0
        %607 = vmatprep.mubr.bf16.mxu0 0
        %608 = vmatmul.mubr.bf16.gmra.mxu0 %v549
        %v609 = vpop.f32.mrf.mxu0
        %v610 = vadd.f32 %v504, %v609
        %v611 = vpop.f32.mrf.mxu0
        %v612 = vpop.f32.mrf.mxu0
        %v613 = vadd.f32 %v504, %v612
        %v614 = vpop.f32.mrf.mxu0
        %615 = vdwg.mxu0
        %616 = vst [vmem:[#allocation3] sm:$0xff] %v586
        %617 = vst [vmem:[#allocation3 + $0x8] sm:$0xff] %v589
        %618 = vst [vmem:[#allocation3 + $0x10] sm:$0xff] %v594
        %619 = vst [vmem:[#allocation3 + $0x18] sm:$0xff] %v597
        %620 = vst [vmem:[#allocation3 + $0x20] sm:$0xff] %v602
        %621 = vst [vmem:[#allocation3 + $0x28] sm:$0xff] %v605
        %622 = vst [vmem:[#allocation3 + $0x30] sm:$0xff] %v610
        %623 = vst [vmem:[#allocation3 + $0x38] sm:$0xff] %v613
      $region60: #{lstm_demo_forward.1} parent=55 // pred_fallthru
        _
      %p624 = scmp.gt.s32.totalorder %s23, 0
      // Predicated region
      $region61: #{lstm_demo_forward.1} parent=55 // pred_check
        %p625 = pneg %p624
      $region62: #{lstm_demo_forward.1} parent=55 // pred_check_branch
        %627 = sbr.rel (%p625) target = $region64
      $region63: #{lstm_demo_forward.1} parent=55 // pred_region
        %v628 = vld [vmem:[#allocation2] sm:$0xff]
        %v629 = vld [vmem:[#allocation2 + $0x8] sm:$0xff]
        %v630 = vld [vmem:[#allocation2 + $0x10] sm:$0xff]
        %v631 = vld [vmem:[#allocation2 + $0x18] sm:$0xff]
        %v632 = vld [vmem:[#allocation2 + $0x20] sm:$0xff]
        %v633 = vld [vmem:[#allocation2 + $0x28] sm:$0xff]
        %v634 = vld [vmem:[#allocation2 + $0x30] sm:$0xff]
        %v635 = vld [vmem:[#allocation2 + $0x38] sm:$0xff]
        %v636 = vpack.c.bf16 %v629, %v628
        %v637 = vpack.c.bf16 %v631, %v630
        %v638 = vpack.c.bf16 %v633, %v632
        %v639 = vpack.c.bf16 %v635, %v634
        %v640 = vld [vmem:[%s454] sm:$0xf]
        %v641 = vld [vmem:[%s454 + $0x4] sm:$0xf]
        %v642 = vld [vmem:[%s454 + $0x8] sm:$0xf]
        %v643 = vld [vmem:[%s454 + $0xc] sm:$0xf]
        %v645 = vlaneseq
        %v646 = vshrl.u32 %v645, 7
        %v647 = vsub.s32 0, %v646
        %v648 = vrot.slane %v483, %v647
        %v654 = vunpack.c.l.b16 %v640
        %v655 = vunpack.c.l.b16 %v641
        %v656 = vunpack.c.l.b16 %v642
        %v657 = vunpack.c.l.b16 %v643
        %v658 = vpack.c.b16 %v655, %v654
        %v659 = vpack.c.b16 %v657, %v656
        %vm662 = vcmask 261120
        %v664 = vsel %vm662, %v636, 0
        %v667 = vsel %vm662, %v637, 0
        %v670 = vsel %vm662, %v638, 0
        %v673 = vsel %vm662, %v639, 0
        %675 = vmatprep.subr.bf16.mxu0 0
        %676 = vmatpush1.bf16.msra.mxu0 0
        %677 = vmatprep.subr.bf16.mxu0 0
        %678 = vmatpush1.bf16.msra.mxu0 0
        %679 = vmatprep.subr.bf16.mxu0 0
        %680 = vmatpush1.bf16.msra.mxu0 0
        %681 = vmatprep.subr.bf16.mxu0 0
        %682 = vmatpush1.bf16.msra.mxu0 0
        %683 = vmatprep.subr.bf16.mxu0 0
        %684 = vmatpush1.bf16.msra.mxu0 0
        %685 = vmatprep.subr.bf16.mxu0 0
        %686 = vmatpush1.bf16.msra.mxu0 0
        %687 = vmatprep.subr.bf16.mxu0 0
        %688 = vmatpush1.bf16.msra.mxu0 %v659
        %689 = vmatprep.subr.bf16.mxu0 0
        %690 = vmatpush1.bf16.msra.mxu0 %v658
        %691 = vmatprep.subr.bf16.mxu0 0
        %692 = vmatpush2.bf16.msra.mxu0 0
        %693 = vmatprep.subr.bf16.mxu0 0
        %694 = vmatpush2.bf16.msra.mxu0 0
        %695 = vmatprep.subr.bf16.mxu0 0
        %696 = vmatpush2.bf16.msra.mxu0 0
        %697 = vmatprep.subr.bf16.mxu0 0
        %698 = vmatpush2.bf16.msra.mxu0 0
        %699 = vmatprep.subr.bf16.mxu0 0
        %700 = vmatpush2.bf16.msra.mxu0 0
        %701 = vmatprep.subr.bf16.mxu0 0
        %702 = vmatpush2.bf16.msra.mxu0 0
        %703 = vmatprep.subr.bf16.mxu0 0
        %704 = vmatpush2.bf16.msra.mxu0 0
        %705 = vmatprep.subr.bf16.mxu0 0
        %706 = vmatpush2.bf16.msra.mxu0 0
        %707 = vmatprep.mubr.bf16.mxu0 0
        %708 = vmatmul.mubr.bf16.gmra.mxu0 %v664
        %v709 = vpop.f32.mrf.mxu0
        %v710 = vadd.f32 %v648, %v709
        %v711 = vpop.f32.mrf.mxu0
        %v712 = vpop.f32.mrf.mxu0
        %v713 = vadd.f32 %v648, %v712
        %v714 = vpop.f32.mrf.mxu0
        %715 = vmatprep.mubr.bf16.mxu0 0
        %716 = vmatmul.mubr.bf16.gmra.mxu0 %v667
        %v717 = vpop.f32.mrf.mxu0
        %v718 = vadd.f32 %v648, %v717
        %v719 = vpop.f32.mrf.mxu0
        %v720 = vpop.f32.mrf.mxu0
        %v721 = vadd.f32 %v648, %v720
        %v722 = vpop.f32.mrf.mxu0
        %723 = vmatprep.mubr.bf16.mxu0 0
        %724 = vmatmul.mubr.bf16.gmra.mxu0 %v670
        %v725 = vpop.f32.mrf.mxu0
        %v726 = vadd.f32 %v648, %v725
        %v727 = vpop.f32.mrf.mxu0
        %v728 = vpop.f32.mrf.mxu0
        %v729 = vadd.f32 %v648, %v728
        %v730 = vpop.f32.mrf.mxu0
        %731 = vmatprep.mubr.bf16.mxu0 0
        %732 = vmatmul.mubr.bf16.gmra.mxu0 %v673
        %v733 = vpop.f32.mrf.mxu0
        %v734 = vadd.f32 %v648, %v733
        %v735 = vpop.f32.mrf.mxu0
        %v736 = vpop.f32.mrf.mxu0
        %v737 = vadd.f32 %v648, %v736
        %v738 = vpop.f32.mrf.mxu0
        %739 = vdwg.mxu0
        %740 = vst [vmem:[#allocation3] sm:$0xff] %v710
        %741 = vst [vmem:[#allocation3 + $0x8] sm:$0xff] %v713
        %742 = vst [vmem:[#allocation3 + $0x10] sm:$0xff] %v718
        %743 = vst [vmem:[#allocation3 + $0x18] sm:$0xff] %v721
        %744 = vst [vmem:[#allocation3 + $0x20] sm:$0xff] %v726
        %745 = vst [vmem:[#allocation3 + $0x28] sm:$0xff] %v729
        %746 = vst [vmem:[#allocation3 + $0x30] sm:$0xff] %v734
        %747 = vst [vmem:[#allocation3 + $0x38] sm:$0xff] %v737
      $region64: #{lstm_demo_forward.1} parent=55 // pred_fallthru
        _
      %v748 = vld [vmem:[%s462] sm:$0xf]
      %v749 = vld [vmem:[%s462 + $0x4] sm:$0xf]
      %v750 = vld [vmem:[%s462 + $0x8] sm:$0xf]
      %v751 = vld [vmem:[%s462 + $0xc] sm:$0xf]
      %v752 = vld [vmem:[%s469] sm:$0xff]
      %v753 = vld [vmem:[%s473] sm:$0xff]
      %v754 = vld [vmem:[#allocation3] sm:$0xff]
      %v755 = vpack.c.bf16 %v752, %v752
      %v760 = vunpack.c.l.b16 %v748
      %v761 = vunpack.c.l.b16 %v749
      %v762 = vunpack.c.l.b16 %v750
      %v763 = vunpack.c.l.b16 %v751
      %v764 = vpack.c.b16 %v761, %v760
      %v765 = vpack.c.b16 %v763, %v762
      %vm768 = vcmask 261120
      %v770 = vsel %vm768, %v755, 0
      %772 = vmatprep.subr.bf16.mxu0 0
      %773 = vmatpush1.bf16.msra.mxu0 0
      %774 = vmatprep.subr.bf16.mxu0 0
      %775 = vmatpush1.bf16.msra.mxu0 0
      %776 = vmatprep.subr.bf16.mxu0 0
      %777 = vmatpush1.bf16.msra.mxu0 0
      %778 = vmatprep.subr.bf16.mxu0 0
      %779 = vmatpush1.bf16.msra.mxu0 0
      %780 = vmatprep.subr.bf16.mxu0 0
      %781 = vmatpush1.bf16.msra.mxu0 0
      %782 = vmatprep.subr.bf16.mxu0 0
      %783 = vmatpush1.bf16.msra.mxu0 0
      %784 = vmatprep.subr.bf16.mxu0 0
      %785 = vmatpush1.bf16.msra.mxu0 %v765
      %786 = vmatprep.subr.bf16.mxu0 0
      %787 = vmatpush1.bf16.msra.mxu0 %v764
      %788 = vmatprep.subr.bf16.mxu0 0
      %789 = vmatpush2.bf16.msra.mxu0 0
      %790 = vmatprep.subr.bf16.mxu0 0
      %791 = vmatpush2.bf16.msra.mxu0 0
      %792 = vmatprep.subr.bf16.mxu0 0
      %793 = vmatpush2.bf16.msra.mxu0 0
      %794 = vmatprep.subr.bf16.mxu0 0
      %795 = vmatpush2.bf16.msra.mxu0 0
      %796 = vmatprep.subr.bf16.mxu0 0
      %797 = vmatpush2.bf16.msra.mxu0 0
      %798 = vmatprep.subr.bf16.mxu0 0
      %799 = vmatpush2.bf16.msra.mxu0 0
      %800 = vmatprep.subr.bf16.mxu0 0
      %801 = vmatpush2.bf16.msra.mxu0 0
      %802 = vmatprep.subr.bf16.mxu0 0
      %803 = vmatpush2.bf16.msra.mxu0 0
      %804 = vmatprep.mubr.bf16.mxu0 0
      %805 = vmatmul.mubr.bf16.gmra.mxu0 %v770
      %v806 = vpop.f32.mrf.mxu0
      %v807 = vadd.f32 0.0, %v806
      %v808 = vpop.f32.mrf.mxu0
      %v809 = vpop.f32.mrf.mxu0
      %v810 = vpop.f32.mrf.mxu0
      %811 = vdwg.mxu0
      %v812 = vadd.f32 %v754, %v807
      %v813 = vxor.u32 %v812, 2147483648
      %v814 = vmul.f32 %v813, 1.442695
      %v815 = vpow.pop %v814
      %v816 = vadd.f32 %v815, 1.0
      %v817 = vrcp.pop %v816
      %v818 = vmul.f32 1.0, %v817
      %v819 = vtanh.pop %v812
      %821 = vrot.lane.b32.xlu0 %v753, 32
      %v822 = vpop.permute.xlu0 %821
      %v824 = vmul.f32 %v818, %v822
      %826 = vrot.lane.b32.xlu0 %v819, 32
      %v827 = vpop.permute.xlu0 %826
      %v829 = vmul.f32 %v818, %v827
      %831 = vrot.lane.b32.xlu0 %v829, 32
      %v832 = vpop.permute.xlu0 %831
      %v834 = vadd.f32 %v824, %v832
      %v835 = vtanh.pop %v834
      %837 = vrot.lane.b32.xlu0 %v835, 32
      %v838 = vpop.permute.xlu0 %837
      %v840 = vmul.f32 %v818, %v838
      %842 = vrot.lane.b32.xlu0 %v840, 64
      %v843 = vpop.permute.xlu0 %842
      %845 = vst.msk [vmem:[#allocation2] sm:$0xff] %vm768, %v843
      %s846 = scalar_lea.vmem [#allocation3], 8
      %v847 = vld [vmem:[%s846] sm:$0xff]
      %v848 = vpack.c.bf16 %v840, %v840
      %850 = vrot.lane.b32.xlu0 %v848, 64
      %v851 = vpop.permute.xlu0 %850
      %v853 = vsel %vm768, %v851, 0
      %855 = vmatprep.subr.bf16.mxu0 0
      %856 = vmatpush1.bf16.msra.mxu0 0
      %857 = vmatprep.subr.bf16.mxu0 0
      %858 = vmatpush1.bf16.msra.mxu0 0
      %859 = vmatprep.subr.bf16.mxu0 0
      %860 = vmatpush1.bf16.msra.mxu0 0
      %861 = vmatprep.subr.bf16.mxu0 0
      %862 = vmatpush1.bf16.msra.mxu0 0
      %863 = vmatprep.subr.bf16.mxu0 0
      %864 = vmatpush1.bf16.msra.mxu0 0
      %865 = vmatprep.subr.bf16.mxu0 0
      %866 = vmatpush1.bf16.msra.mxu0 0
      %867 = vmatprep.subr.bf16.mxu0 0
      %868 = vmatpush1.bf16.msra.mxu0 %v765
      %869 = vmatprep.subr.bf16.mxu0 0
      %870 = vmatpush1.bf16.msra.mxu0 %v764
      %871 = vmatprep.subr.bf16.mxu0 0
      %872 = vmatpush2.bf16.msra.mxu0 0
      %873 = vmatprep.subr.bf16.mxu0 0
      %874 = vmatpush2.bf16.msra.mxu0 0
      %875 = vmatprep.subr.bf16.mxu0 0
      %876 = vmatpush2.bf16.msra.mxu0 0
      %877 = vmatprep.subr.bf16.mxu0 0
      %878 = vmatpush2.bf16.msra.mxu0 0
      %879 = vmatprep.subr.bf16.mxu0 0
      %880 = vmatpush2.bf16.msra.mxu0 0
      %881 = vmatprep.subr.bf16.mxu0 0
      %882 = vmatpush2.bf16.msra.mxu0 0
      %883 = vmatprep.subr.bf16.mxu0 0
      %884 = vmatpush2.bf16.msra.mxu0 0
      %885 = vmatprep.subr.bf16.mxu0 0
      %886 = vmatpush2.bf16.msra.mxu0 0
      %887 = vmatprep.mubr.bf16.mxu0 0
      %888 = vmatmul.mubr.bf16.gmra.mxu0 %v853
      %v889 = vpop.f32.mrf.mxu0
      %v890 = vadd.f32 0.0, %v889
      %v891 = vpop.f32.mrf.mxu0
      %v892 = vpop.f32.mrf.mxu0
      %v893 = vpop.f32.mrf.mxu0
      %894 = vdwg.mxu0
      %v895 = vadd.f32 %v847, %v890
      %v896 = vxor.u32 %v895, 2147483648
      %v897 = vmul.f32 %v896, 1.442695
      %v898 = vpow.pop %v897
      %v899 = vadd.f32 %v898, 1.0
      %v900 = vrcp.pop %v899
      %v901 = vmul.f32 1.0, %v900
      %v902 = vtanh.pop %v895
      %v903 = vmul.f32 %v901, %v834
      %905 = vrot.lane.b32.xlu0 %v902, 32
      %v906 = vpop.permute.xlu0 %905
      %v908 = vmul.f32 %v901, %v906
      %910 = vrot.lane.b32.xlu0 %v908, 32
      %v911 = vpop.permute.xlu0 %910
      %v913 = vadd.f32 %v903, %v911
      %v914 = vtanh.pop %v913
      %916 = vrot.lane.b32.xlu0 %v914, 32
      %v917 = vpop.permute.xlu0 %916
      %v919 = vmul.f32 %v901, %v917
      %921 = vrot.lane.b32.xlu0 %v919, 64
      %v922 = vpop.permute.xlu0 %921
      %s924 = scalar_lea.vmem [#allocation2], 8
      %925 = vst.msk [vmem:[%s924] sm:$0xff] %vm768, %v922
      %s926 = scalar_lea.vmem [#allocation3], 16
      %v927 = vld [vmem:[%s926] sm:$0xff]
      %v928 = vpack.c.bf16 %v919, %v919
      %930 = vrot.lane.b32.xlu0 %v928, 64
      %v931 = vpop.permute.xlu0 %930
      %v933 = vsel %vm768, %v931, 0
      %935 = vmatprep.subr.bf16.mxu0 0
      %936 = vmatpush1.bf16.msra.mxu0 0
      %937 = vmatprep.subr.bf16.mxu0 0
      %938 = vmatpush1.bf16.msra.mxu0 0
      %939 = vmatprep.subr.bf16.mxu0 0
      %940 = vmatpush1.bf16.msra.mxu0 0
      %941 = vmatprep.subr.bf16.mxu0 0
      %942 = vmatpush1.bf16.msra.mxu0 0
      %943 = vmatprep.subr.bf16.mxu0 0
      %944 = vmatpush1.bf16.msra.mxu0 0
      %945 = vmatprep.subr.bf16.mxu0 0
      %946 = vmatpush1.bf16.msra.mxu0 0
      %947 = vmatprep.subr.bf16.mxu0 0
      %948 = vmatpush1.bf16.msra.mxu0 %v765
      %949 = vmatprep.subr.bf16.mxu0 0
      %950 = vmatpush1.bf16.msra.mxu0 %v764
      %951 = vmatprep.subr.bf16.mxu0 0
      %952 = vmatpush2.bf16.msra.mxu0 0
      %953 = vmatprep.subr.bf16.mxu0 0
      %954 = vmatpush2.bf16.msra.mxu0 0
      %955 = vmatprep.subr.bf16.mxu0 0
      %956 = vmatpush2.bf16.msra.mxu0 0
      %957 = vmatprep.subr.bf16.mxu0 0
      %958 = vmatpush2.bf16.msra.mxu0 0
      %959 = vmatprep.subr.bf16.mxu0 0
      %960 = vmatpush2.bf16.msra.mxu0 0
      %961 = vmatprep.subr.bf16.mxu0 0
      %962 = vmatpush2.bf16.msra.mxu0 0
      %963 = vmatprep.subr.bf16.mxu0 0
      %964 = vmatpush2.bf16.msra.mxu0 0
      %965 = vmatprep.subr.bf16.mxu0 0
      %966 = vmatpush2.bf16.msra.mxu0 0
      %967 = vmatprep.mubr.bf16.mxu0 0
      %968 = vmatmul.mubr.bf16.gmra.mxu0 %v933
      %v969 = vpop.f32.mrf.mxu0
      %v970 = vadd.f32 0.0, %v969
      %v971 = vpop.f32.mrf.mxu0
      %v972 = vpop.f32.mrf.mxu0
      %v973 = vpop.f32.mrf.mxu0
      %974 = vdwg.mxu0
      %v975 = vadd.f32 %v927, %v970
      %v976 = vxor.u32 %v975, 2147483648
      %v977 = vmul.f32 %v976, 1.442695
      %v978 = vpow.pop %v977
      %v979 = vadd.f32 %v978, 1.0
      %v980 = vrcp.pop %v979
      %v981 = vmul.f32 1.0, %v980
      %v982 = vtanh.pop %v975
      %v983 = vmul.f32 %v981, %v913
      %985 = vrot.lane.b32.xlu0 %v982, 32
      %v986 = vpop.permute.xlu0 %985
      %v988 = vmul.f32 %v981, %v986
      %990 = vrot.lane.b32.xlu0 %v988, 32
      %v991 = vpop.permute.xlu0 %990
      %v993 = vadd.f32 %v983, %v991
      %v994 = vtanh.pop %v993
      %996 = vrot.lane.b32.xlu0 %v994, 32
      %v997 = vpop.permute.xlu0 %996
      %v999 = vmul.f32 %v981, %v997
      %1001 = vrot.lane.b32.xlu0 %v999, 64
      %v1002 = vpop.permute.xlu0 %1001
      %s1004 = scalar_lea.vmem [#allocation2], 16
      %1005 = vst.msk [vmem:[%s1004] sm:$0xff] %vm768, %v1002
      %s1006 = scalar_lea.vmem [#allocation3], 24
      %v1007 = vld [vmem:[%s1006] sm:$0xff]
      %v1008 = vpack.c.bf16 %v999, %v999
      %1010 = vrot.lane.b32.xlu0 %v1008, 64
      %v1011 = vpop.permute.xlu0 %1010
      %v1013 = vsel %vm768, %v1011, 0
      %1015 = vmatprep.subr.bf16.mxu0 0
      %1016 = vmatpush1.bf16.msra.mxu0 0
      %1017 = vmatprep.subr.bf16.mxu0 0
      %1018 = vmatpush1.bf16.msra.mxu0 0
      %1019 = vmatprep.subr.bf16.mxu0 0
      %1020 = vmatpush1.bf16.msra.mxu0 0
      %1021 = vmatprep.subr.bf16.mxu0 0
      %1022 = vmatpush1.bf16.msra.mxu0 0
      %1023 = vmatprep.subr.bf16.mxu0 0
      %1024 = vmatpush1.bf16.msra.mxu0 0
      %1025 = vmatprep.subr.bf16.mxu0 0
      %1026 = vmatpush1.bf16.msra.mxu0 0
      %1027 = vmatprep.subr.bf16.mxu0 0
      %1028 = vmatpush1.bf16.msra.mxu0 %v765
      %1029 = vmatprep.subr.bf16.mxu0 0
      %1030 = vmatpush1.bf16.msra.mxu0 %v764
      %1031 = vmatprep.subr.bf16.mxu0 0
      %1032 = vmatpush2.bf16.msra.mxu0 0
      %1033 = vmatprep.subr.bf16.mxu0 0
      %1034 = vmatpush2.bf16.msra.mxu0 0
      %1035 = vmatprep.subr.bf16.mxu0 0
      %1036 = vmatpush2.bf16.msra.mxu0 0
      %1037 = vmatprep.subr.bf16.mxu0 0
      %1038 = vmatpush2.bf16.msra.mxu0 0
      %1039 = vmatprep.subr.bf16.mxu0 0
      %1040 = vmatpush2.bf16.msra.mxu0 0
      %1041 = vmatprep.subr.bf16.mxu0 0
      %1042 = vmatpush2.bf16.msra.mxu0 0
      %1043 = vmatprep.subr.bf16.mxu0 0
      %1044 = vmatpush2.bf16.msra.mxu0 0
      %1045 = vmatprep.subr.bf16.mxu0 0
      %1046 = vmatpush2.bf16.msra.mxu0 0
      %1047 = vmatprep.mubr.bf16.mxu0 0
      %1048 = vmatmul.mubr.bf16.gmra.mxu0 %v1013
      %v1049 = vpop.f32.mrf.mxu0
      %v1050 = vadd.f32 0.0, %v1049
      %v1051 = vpop.f32.mrf.mxu0
      %v1052 = vpop.f32.mrf.mxu0
      %v1053 = vpop.f32.mrf.mxu0
      %1054 = vdwg.mxu0
      %v1055 = vadd.f32 %v1007, %v1050
      %v1056 = vxor.u32 %v1055, 2147483648
      %v1057 = vmul.f32 %v1056, 1.442695
      %v1058 = vpow.pop %v1057
      %v1059 = vadd.f32 %v1058, 1.0
      %v1060 = vrcp.pop %v1059
      %v1061 = vmul.f32 1.0, %v1060
      %v1062 = vtanh.pop %v1055
      %v1063 = vmul.f32 %v1061, %v993
      %1065 = vrot.lane.b32.xlu0 %v1062, 32
      %v1066 = vpop.permute.xlu0 %1065
      %v1068 = vmul.f32 %v1061, %v1066
      %1070 = vrot.lane.b32.xlu0 %v1068, 32
      %v1071 = vpop.permute.xlu0 %1070
      %v1073 = vadd.f32 %v1063, %v1071
      %v1074 = vtanh.pop %v1073
      %1076 = vrot.lane.b32.xlu0 %v1074, 32
      %v1077 = vpop.permute.xlu0 %1076
      %v1079 = vmul.f32 %v1061, %v1077
      %1081 = vrot.lane.b32.xlu0 %v1079, 64
      %v1082 = vpop.permute.xlu0 %1081
      %s1084 = scalar_lea.vmem [#allocation2], 24
      %1085 = vst.msk [vmem:[%s1084] sm:$0xff] %vm768, %v1082
      %s1086 = scalar_lea.vmem [#allocation3], 32
      %v1087 = vld [vmem:[%s1086] sm:$0xff]
      %v1088 = vpack.c.bf16 %v1079, %v1079
      %1090 = vrot.lane.b32.xlu0 %v1088, 64
      %v1091 = vpop.permute.xlu0 %1090
      %v1093 = vsel %vm768, %v1091, 0
      %1095 = vmatprep.subr.bf16.mxu0 0
      %1096 = vmatpush1.bf16.msra.mxu0 0
      %1097 = vmatprep.subr.bf16.mxu0 0
      %1098 = vmatpush1.bf16.msra.mxu0 0
      %1099 = vmatprep.subr.bf16.mxu0 0
      %1100 = vmatpush1.bf16.msra.mxu0 0
      %1101 = vmatprep.subr.bf16.mxu0 0
      %1102 = vmatpush1.bf16.msra.mxu0 0
      %1103 = vmatprep.subr.bf16.mxu0 0
      %1104 = vmatpush1.bf16.msra.mxu0 0
      %1105 = vmatprep.subr.bf16.mxu0 0
      %1106 = vmatpush1.bf16.msra.mxu0 0
      %1107 = vmatprep.subr.bf16.mxu0 0
      %1108 = vmatpush1.bf16.msra.mxu0 %v765
      %1109 = vmatprep.subr.bf16.mxu0 0
      %1110 = vmatpush1.bf16.msra.mxu0 %v764
      %1111 = vmatprep.subr.bf16.mxu0 0
      %1112 = vmatpush2.bf16.msra.mxu0 0
      %1113 = vmatprep.subr.bf16.mxu0 0
      %1114 = vmatpush2.bf16.msra.mxu0 0
      %1115 = vmatprep.subr.bf16.mxu0 0
      %1116 = vmatpush2.bf16.msra.mxu0 0
      %1117 = vmatprep.subr.bf16.mxu0 0
      %1118 = vmatpush2.bf16.msra.mxu0 0
      %1119 = vmatprep.subr.bf16.mxu0 0
      %1120 = vmatpush2.bf16.msra.mxu0 0
      %1121 = vmatprep.subr.bf16.mxu0 0
      %1122 = vmatpush2.bf16.msra.mxu0 0
      %1123 = vmatprep.subr.bf16.mxu0 0
      %1124 = vmatpush2.bf16.msra.mxu0 0
      %1125 = vmatprep.subr.bf16.mxu0 0
      %1126 = vmatpush2.bf16.msra.mxu0 0
      %1127 = vmatprep.mubr.bf16.mxu0 0
      %1128 = vmatmul.mubr.bf16.gmra.mxu0 %v1093
      %v1129 = vpop.f32.mrf.mxu0
      %v1130 = vadd.f32 0.0, %v1129
      %v1131 = vpop.f32.mrf.mxu0
      %v1132 = vpop.f32.mrf.mxu0
      %v1133 = vpop.f32.mrf.mxu0
      %1134 = vdwg.mxu0
      %v1135 = vadd.f32 %v1087, %v1130
      %v1136 = vxor.u32 %v1135, 2147483648
      %v1137 = vmul.f32 %v1136, 1.442695
      %v1138 = vpow.pop %v1137
      %v1139 = vadd.f32 %v1138, 1.0
      %v1140 = vrcp.pop %v1139
      %v1141 = vmul.f32 1.0, %v1140
      %v1142 = vtanh.pop %v1135
      %v1143 = vmul.f32 %v1141, %v1073
      %1145 = vrot.lane.b32.xlu0 %v1142, 32
      %v1146 = vpop.permute.xlu0 %1145
      %v1148 = vmul.f32 %v1141, %v1146
      %1150 = vrot.lane.b32.xlu0 %v1148, 32
      %v1151 = vpop.permute.xlu0 %1150
      %v1153 = vadd.f32 %v1143, %v1151
      %v1154 = vtanh.pop %v1153
      %1156 = vrot.lane.b32.xlu0 %v1154, 32
      %v1157 = vpop.permute.xlu0 %1156
      %v1159 = vmul.f32 %v1141, %v1157
      %1161 = vrot.lane.b32.xlu0 %v1159, 64
      %v1162 = vpop.permute.xlu0 %1161
      %s1164 = scalar_lea.vmem [#allocation2], 32
      %1165 = vst.msk [vmem:[%s1164] sm:$0xff] %vm768, %v1162
      %s1166 = scalar_lea.vmem [#allocation3], 40
      %v1167 = vld [vmem:[%s1166] sm:$0xff]
      %v1168 = vpack.c.bf16 %v1159, %v1159
      %1170 = vrot.lane.b32.xlu0 %v1168, 64
      %v1171 = vpop.permute.xlu0 %1170
      %v1173 = vsel %vm768, %v1171, 0
      %1175 = vmatprep.subr.bf16.mxu0 0
      %1176 = vmatpush1.bf16.msra.mxu0 0
      %1177 = vmatprep.subr.bf16.mxu0 0
      %1178 = vmatpush1.bf16.msra.mxu0 0
      %1179 = vmatprep.subr.bf16.mxu0 0
      %1180 = vmatpush1.bf16.msra.mxu0 0
      %1181 = vmatprep.subr.bf16.mxu0 0
      %1182 = vmatpush1.bf16.msra.mxu0 0
      %1183 = vmatprep.subr.bf16.mxu0 0
      %1184 = vmatpush1.bf16.msra.mxu0 0
      %1185 = vmatprep.subr.bf16.mxu0 0
      %1186 = vmatpush1.bf16.msra.mxu0 0
      %1187 = vmatprep.subr.bf16.mxu0 0
      %1188 = vmatpush1.bf16.msra.mxu0 %v765
      %1189 = vmatprep.subr.bf16.mxu0 0
      %1190 = vmatpush1.bf16.msra.mxu0 %v764
      %1191 = vmatprep.subr.bf16.mxu0 0
      %1192 = vmatpush2.bf16.msra.mxu0 0
      %1193 = vmatprep.subr.bf16.mxu0 0
      %1194 = vmatpush2.bf16.msra.mxu0 0
      %1195 = vmatprep.subr.bf16.mxu0 0
      %1196 = vmatpush2.bf16.msra.mxu0 0
      %1197 = vmatprep.subr.bf16.mxu0 0
      %1198 = vmatpush2.bf16.msra.mxu0 0
      %1199 = vmatprep.subr.bf16.mxu0 0
      %1200 = vmatpush2.bf16.msra.mxu0 0
      %1201 = vmatprep.subr.bf16.mxu0 0
      %1202 = vmatpush2.bf16.msra.mxu0 0
      %1203 = vmatprep.subr.bf16.mxu0 0
      %1204 = vmatpush2.bf16.msra.mxu0 0
      %1205 = vmatprep.subr.bf16.mxu0 0
      %1206 = vmatpush2.bf16.msra.mxu0 0
      %1207 = vmatprep.mubr.bf16.mxu0 0
      %1208 = vmatmul.mubr.bf16.gmra.mxu0 %v1173
      %v1209 = vpop.f32.mrf.mxu0
      %v1210 = vadd.f32 0.0, %v1209
      %v1211 = vpop.f32.mrf.mxu0
      %v1212 = vpop.f32.mrf.mxu0
      %v1213 = vpop.f32.mrf.mxu0
      %1214 = vdwg.mxu0
      %v1215 = vadd.f32 %v1167, %v1210
      %v1216 = vxor.u32 %v1215, 2147483648
      %v1217 = vmul.f32 %v1216, 1.442695
      %v1218 = vpow.pop %v1217
      %v1219 = vadd.f32 %v1218, 1.0
      %v1220 = vrcp.pop %v1219
      %v1221 = vmul.f32 1.0, %v1220
      %v1222 = vtanh.pop %v1215
      %v1223 = vmul.f32 %v1221, %v1153
      %1225 = vrot.lane.b32.xlu0 %v1222, 32
      %v1226 = vpop.permute.xlu0 %1225
      %v1228 = vmul.f32 %v1221, %v1226
      %1230 = vrot.lane.b32.xlu0 %v1228, 32
      %v1231 = vpop.permute.xlu0 %1230
      %v1233 = vadd.f32 %v1223, %v1231
      %v1234 = vtanh.pop %v1233
      %1236 = vrot.lane.b32.xlu0 %v1234, 32
      %v1237 = vpop.permute.xlu0 %1236
      %v1239 = vmul.f32 %v1221, %v1237
      %1241 = vrot.lane.b32.xlu0 %v1239, 64
      %v1242 = vpop.permute.xlu0 %1241
      %s1244 = scalar_lea.vmem [#allocation2], 40
      %1245 = vst.msk [vmem:[%s1244] sm:$0xff] %vm768, %v1242
      %s1246 = scalar_lea.vmem [#allocation3], 48
      %v1247 = vld [vmem:[%s1246] sm:$0xff]
      %v1248 = vpack.c.bf16 %v1239, %v1239
      %1250 = vrot.lane.b32.xlu0 %v1248, 64
      %v1251 = vpop.permute.xlu0 %1250
      %v1253 = vsel %vm768, %v1251, 0
      %1255 = vmatprep.subr.bf16.mxu0 0
      %1256 = vmatpush1.bf16.msra.mxu0 0
      %1257 = vmatprep.subr.bf16.mxu0 0
      %1258 = vmatpush1.bf16.msra.mxu0 0
      %1259 = vmatprep.subr.bf16.mxu0 0
      %1260 = vmatpush1.bf16.msra.mxu0 0
      %1261 = vmatprep.subr.bf16.mxu0 0
      %1262 = vmatpush1.bf16.msra.mxu0 0
      %1263 = vmatprep.subr.bf16.mxu0 0
      %1264 = vmatpush1.bf16.msra.mxu0 0
      %1265 = vmatprep.subr.bf16.mxu0 0
      %1266 = vmatpush1.bf16.msra.mxu0 0
      %1267 = vmatprep.subr.bf16.mxu0 0
      %1268 = vmatpush1.bf16.msra.mxu0 %v765
      %1269 = vmatprep.subr.bf16.mxu0 0
      %1270 = vmatpush1.bf16.msra.mxu0 %v764
      %1271 = vmatprep.subr.bf16.mxu0 0
      %1272 = vmatpush2.bf16.msra.mxu0 0
      %1273 = vmatprep.subr.bf16.mxu0 0
      %1274 = vmatpush2.bf16.msra.mxu0 0
      %1275 = vmatprep.subr.bf16.mxu0 0
      %1276 = vmatpush2.bf16.msra.mxu0 0
      %1277 = vmatprep.subr.bf16.mxu0 0
      %1278 = vmatpush2.bf16.msra.mxu0 0
      %1279 = vmatprep.subr.bf16.mxu0 0
      %1280 = vmatpush2.bf16.msra.mxu0 0
      %1281 = vmatprep.subr.bf16.mxu0 0
      %1282 = vmatpush2.bf16.msra.mxu0 0
      %1283 = vmatprep.subr.bf16.mxu0 0
      %1284 = vmatpush2.bf16.msra.mxu0 0
      %1285 = vmatprep.subr.bf16.mxu0 0
      %1286 = vmatpush2.bf16.msra.mxu0 0
      %1287 = vmatprep.mubr.bf16.mxu0 0
      %1288 = vmatmul.mubr.bf16.gmra.mxu0 %v1253
      %v1289 = vpop.f32.mrf.mxu0
      %v1290 = vadd.f32 0.0, %v1289
      %v1291 = vpop.f32.mrf.mxu0
      %v1292 = vpop.f32.mrf.mxu0
      %v1293 = vpop.f32.mrf.mxu0
      %1294 = vdwg.mxu0
      %v1295 = vadd.f32 %v1247, %v1290
      %v1296 = vxor.u32 %v1295, 2147483648
      %v1297 = vmul.f32 %v1296, 1.442695
      %v1298 = vpow.pop %v1297
      %v1299 = vadd.f32 %v1298, 1.0
      %v1300 = vrcp.pop %v1299
      %v1301 = vmul.f32 1.0, %v1300
      %v1302 = vtanh.pop %v1295
      %v1303 = vmul.f32 %v1301, %v1233
      %1305 = vrot.lane.b32.xlu0 %v1302, 32
      %v1306 = vpop.permute.xlu0 %1305
      %v1308 = vmul.f32 %v1301, %v1306
      %1310 = vrot.lane.b32.xlu0 %v1308, 32
      %v1311 = vpop.permute.xlu0 %1310
      %v1313 = vadd.f32 %v1303, %v1311
      %v1314 = vtanh.pop %v1313
      %1316 = vrot.lane.b32.xlu0 %v1314, 32
      %v1317 = vpop.permute.xlu0 %1316
      %v1319 = vmul.f32 %v1301, %v1317
      %1321 = vrot.lane.b32.xlu0 %v1319, 64
      %v1322 = vpop.permute.xlu0 %1321
      %s1324 = scalar_lea.vmem [#allocation2], 48
      %1325 = vst.msk [vmem:[%s1324] sm:$0xff] %vm768, %v1322
      %s1326 = scalar_lea.vmem [#allocation3], 56
      %v1327 = vld [vmem:[%s1326] sm:$0xff]
      %v1328 = vpack.c.bf16 %v1319, %v1319
      %1330 = vrot.lane.b32.xlu0 %v1328, 64
      %v1331 = vpop.permute.xlu0 %1330
      %v1333 = vsel %vm768, %v1331, 0
      %1335 = vmatprep.subr.bf16.mxu0 0
      %1336 = vmatpush1.bf16.msra.mxu0 0
      %1337 = vmatprep.subr.bf16.mxu0 0
      %1338 = vmatpush1.bf16.msra.mxu0 0
      %1339 = vmatprep.subr.bf16.mxu0 0
      %1340 = vmatpush1.bf16.msra.mxu0 0
      %1341 = vmatprep.subr.bf16.mxu0 0
      %1342 = vmatpush1.bf16.msra.mxu0 0
      %1343 = vmatprep.subr.bf16.mxu0 0
      %1344 = vmatpush1.bf16.msra.mxu0 0
      %1345 = vmatprep.subr.bf16.mxu0 0
      %1346 = vmatpush1.bf16.msra.mxu0 0
      %1347 = vmatprep.subr.bf16.mxu0 0
      %1348 = vmatpush1.bf16.msra.mxu0 %v765
      %1349 = vmatprep.subr.bf16.mxu0 0
      %1350 = vmatpush1.bf16.msra.mxu0 %v764
      %1351 = vmatprep.subr.bf16.mxu0 0
      %1352 = vmatpush2.bf16.msra.mxu0 0
      %1353 = vmatprep.subr.bf16.mxu0 0
      %1354 = vmatpush2.bf16.msra.mxu0 0
      %1355 = vmatprep.subr.bf16.mxu0 0
      %1356 = vmatpush2.bf16.msra.mxu0 0
      %1357 = vmatprep.subr.bf16.mxu0 0
      %1358 = vmatpush2.bf16.msra.mxu0 0
      %1359 = vmatprep.subr.bf16.mxu0 0
      %1360 = vmatpush2.bf16.msra.mxu0 0
      %1361 = vmatprep.subr.bf16.mxu0 0
      %1362 = vmatpush2.bf16.msra.mxu0 0
      %1363 = vmatprep.subr.bf16.mxu0 0
      %1364 = vmatpush2.bf16.msra.mxu0 0
      %1365 = vmatprep.subr.bf16.mxu0 0
      %1366 = vmatpush2.bf16.msra.mxu0 0
      %1367 = vmatprep.mubr.bf16.mxu0 0
      %1368 = vmatmul.mubr.bf16.gmra.mxu0 %v1333
      %v1369 = vpop.f32.mrf.mxu0
      %v1370 = vadd.f32 0.0, %v1369
      %v1371 = vpop.f32.mrf.mxu0
      %v1372 = vpop.f32.mrf.mxu0
      %v1373 = vpop.f32.mrf.mxu0
      %1374 = vdwg.mxu0
      %v1375 = vadd.f32 %v1327, %v1370
      %v1376 = vxor.u32 %v1375, 2147483648
      %v1377 = vmul.f32 %v1376, 1.442695
      %v1378 = vpow.pop %v1377
      %v1379 = vadd.f32 %v1378, 1.0
      %v1380 = vrcp.pop %v1379
      %v1381 = vmul.f32 1.0, %v1380
      %v1382 = vtanh.pop %v1375
      %v1383 = vmul.f32 %v1381, %v1313
      %1385 = vrot.lane.b32.xlu0 %v1382, 32
      %v1386 = vpop.permute.xlu0 %1385
      %v1388 = vmul.f32 %v1381, %v1386
      %1390 = vrot.lane.b32.xlu0 %v1388, 32
      %v1391 = vpop.permute.xlu0 %1390
      %v1393 = vadd.f32 %v1383, %v1391
      %v1394 = vtanh.pop %v1393
      %1396 = vrot.lane.b32.xlu0 %v1394, 32
      %v1397 = vpop.permute.xlu0 %1396
      %v1399 = vmul.f32 %v1381, %v1397
      %1401 = vrot.lane.b32.xlu0 %v1399, 64
      %v1402 = vpop.permute.xlu0 %1401
      %s1404 = scalar_lea.vmem [#allocation2], 56
      %1405 = vst.msk [vmem:[%s1404] sm:$0xff] %vm768, %v1402
      %1406 = vst.msk [vmem:[%s477] sm:$0xff] %vm768, %v1402
      %1408 = vrot.lane.b32.xlu0 %v1393, 96
      %v1409 = vpop.permute.xlu0 %1408
      %1411 = vst.msk [vmem:[%s481] sm:$0xff] %vm768, %v1409
      %p1412 = scmp.eq.s32.totalorder %s23, 1
      // Predicated region
      $region65: #{lstm_demo_forward.1} parent=55 // pred_check
        %p1413 = pneg %p1412
      $region66: #{lstm_demo_forward.1} parent=55 // pred_check_branch
        %1415 = sbr.rel (%p1413) target = $region68
      $region67: #{lstm_demo_forward.1} parent=55 // pred_region
        %v1416 = vld [vmem:[#allocation2] sm:$0xff]
        %v1417 = vld [vmem:[#allocation2 + $0x8] sm:$0xff]
        %v1418 = vld [vmem:[#allocation2 + $0x10] sm:$0xff]
        %v1419 = vld [vmem:[#allocation2 + $0x18] sm:$0xff]
        %v1420 = vld [vmem:[#allocation2 + $0x20] sm:$0xff]
        %v1421 = vld [vmem:[#allocation2 + $0x28] sm:$0xff]
        %v1422 = vld [vmem:[#allocation2 + $0x30] sm:$0xff]
        %v1423 = vld [vmem:[#allocation2 + $0x38] sm:$0xff]
        %v1424 = vpack.c.bf16 %v1417, %v1416
        %v1425 = vpack.c.bf16 %v1419, %v1418
        %v1426 = vpack.c.bf16 %v1421, %v1420
        %v1427 = vpack.c.bf16 %v1423, %v1422
        %v1428 = vld [vmem:[%s7] sm:$0xf]
        %v1429 = vld [vmem:[%s7 + $0x4] sm:$0xf]
        %v1430 = vld [vmem:[%s7 + $0x8] sm:$0xf]
        %v1431 = vld [vmem:[%s7 + $0xc] sm:$0xf]
        %v1432 = vld [vmem:[%s8] sm:$0x1]
        %v1434 = vlaneseq
        %v1435 = vshrl.u32 %v1434, 7
        %v1436 = vsub.s32 0, %v1435
        %v1437 = vrot.slane %v1432, %v1436
        %v1443 = vunpack.c.l.b16 %v1428
        %v1444 = vunpack.c.l.b16 %v1429
        %v1445 = vunpack.c.l.b16 %v1430
        %v1446 = vunpack.c.l.b16 %v1431
        %v1447 = vpack.c.b16 %v1444, %v1443
        %v1448 = vpack.c.b16 %v1446, %v1445
        %v1452 = vsel %vm768, %v1424, 0
        %v1455 = vsel %vm768, %v1425, 0
        %v1458 = vsel %vm768, %v1426, 0
        %v1461 = vsel %vm768, %v1427, 0
        %1463 = vmatprep.subr.bf16.mxu0 0
        %1464 = vmatpush1.bf16.msra.mxu0 0
        %1465 = vmatprep.subr.bf16.mxu0 0
        %1466 = vmatpush1.bf16.msra.mxu0 0
        %1467 = vmatprep.subr.bf16.mxu0 0
        %1468 = vmatpush1.bf16.msra.mxu0 0
        %1469 = vmatprep.subr.bf16.mxu0 0
        %1470 = vmatpush1.bf16.msra.mxu0 0
        %1471 = vmatprep.subr.bf16.mxu0 0
        %1472 = vmatpush1.bf16.msra.mxu0 0
        %1473 = vmatprep.subr.bf16.mxu0 0
        %1474 = vmatpush1.bf16.msra.mxu0 0
        %1475 = vmatprep.subr.bf16.mxu0 0
        %1476 = vmatpush1.bf16.msra.mxu0 %v1448
        %1477 = vmatprep.subr.bf16.mxu0 0
        %1478 = vmatpush1.bf16.msra.mxu0 %v1447
        %1479 = vmatprep.subr.bf16.mxu0 0
        %1480 = vmatpush2.bf16.msra.mxu0 0
        %1481 = vmatprep.subr.bf16.mxu0 0
        %1482 = vmatpush2.bf16.msra.mxu0 0
        %1483 = vmatprep.subr.bf16.mxu0 0
        %1484 = vmatpush2.bf16.msra.mxu0 0
        %1485 = vmatprep.subr.bf16.mxu0 0
        %1486 = vmatpush2.bf16.msra.mxu0 0
        %1487 = vmatprep.subr.bf16.mxu0 0
        %1488 = vmatpush2.bf16.msra.mxu0 0
        %1489 = vmatprep.subr.bf16.mxu0 0
        %1490 = vmatpush2.bf16.msra.mxu0 0
        %1491 = vmatprep.subr.bf16.mxu0 0
        %1492 = vmatpush2.bf16.msra.mxu0 0
        %1493 = vmatprep.subr.bf16.mxu0 0
        %1494 = vmatpush2.bf16.msra.mxu0 0
        %1495 = vmatprep.mubr.bf16.mxu0 0
        %1496 = vmatmul.mubr.bf16.gmra.mxu0 %v1452
        %v1497 = vpop.f32.mrf.mxu0
        %v1498 = vadd.f32 %v1437, %v1497
        %v1499 = vpop.f32.mrf.mxu0
        %v1500 = vpop.f32.mrf.mxu0
        %v1501 = vadd.f32 %v1437, %v1500
        %v1502 = vpop.f32.mrf.mxu0
        %1503 = vmatprep.mubr.bf16.mxu0 0
        %1504 = vmatmul.mubr.bf16.gmra.mxu0 %v1455
        %v1505 = vpop.f32.mrf.mxu0
        %v1506 = vadd.f32 %v1437, %v1505
        %v1507 = vpop.f32.mrf.mxu0
        %v1508 = vpop.f32.mrf.mxu0
        %v1509 = vadd.f32 %v1437, %v1508
        %v1510 = vpop.f32.mrf.mxu0
        %1511 = vmatprep.mubr.bf16.mxu0 0
        %1512 = vmatmul.mubr.bf16.gmra.mxu0 %v1458
        %v1513 = vpop.f32.mrf.mxu0
        %v1514 = vadd.f32 %v1437, %v1513
        %v1515 = vpop.f32.mrf.mxu0
        %v1516 = vpop.f32.mrf.mxu0
        %v1517 = vadd.f32 %v1437, %v1516
        %v1518 = vpop.f32.mrf.mxu0
        %1519 = vmatprep.mubr.bf16.mxu0 0
        %1520 = vmatmul.mubr.bf16.gmra.mxu0 %v1461
        %v1521 = vpop.f32.mrf.mxu0
        %v1522 = vadd.f32 %v1437, %v1521
        %v1523 = vpop.f32.mrf.mxu0
        %v1524 = vpop.f32.mrf.mxu0
        %v1525 = vadd.f32 %v1437, %v1524
        %v1526 = vpop.f32.mrf.mxu0
        %1527 = vdwg.mxu0
        %1528 = vst [vmem:[%s9] sm:$0xff] %v1498
        %1529 = vst [vmem:[%s9 + $0x8] sm:$0xff] %v1501
        %1530 = vst [vmem:[%s9 + $0x10] sm:$0xff] %v1506
        %1531 = vst [vmem:[%s9 + $0x18] sm:$0xff] %v1509
        %1532 = vst [vmem:[%s9 + $0x20] sm:$0xff] %v1514
        %1533 = vst [vmem:[%s9 + $0x28] sm:$0xff] %v1517
        %1534 = vst [vmem:[%s9 + $0x30] sm:$0xff] %v1522
        %1535 = vst [vmem:[%s9 + $0x38] sm:$0xff] %v1525
      $region68: #{lstm_demo_forward.1} parent=55 // pred_fallthru
        _
      %p1536 = scmp.lt.s32.totalorder %s23, 1
      %s1537 = scalar_select %p1536, %s23, 1
      %s1538 = smul.addr %s1537, 8
      %s1539 = scalar_lea.vmem %s10, %s1538
      %p1540 = scmp.lt.s32.totalorder %s23, 1
      %s1541 = scalar_select %p1540, %s23, 1
      %s1542 = smul.addr %s1541, 8
      %s1543 = scalar_lea.vmem %s11, %s1542
      // Predicated region
      $region69: #{lstm_demo_forward.1} parent=55 // pred_check
        %p1544 = pneg %p256
      $region70: #{lstm_demo_forward.1} parent=55 // pred_check_branch
        %1546 = sbr.rel (%p1544) target = $region72
      $region71: #{lstm_demo_forward.1} parent=55 // pred_region
        _
      $region72: #{lstm_demo_forward.1} parent=55 // pred_fallthru
        _
      // Predicated region
      $region73: #{lstm_demo_forward.1} parent=55 // pred_check
        %p1547 = pneg %p282
      $region74: #{lstm_demo_forward.1} parent=55 // pred_check_branch
        %1549 = sbr.rel (%p1547) target = $region76
      $region75: #{lstm_demo_forward.1} parent=55 // pred_region
        _
      $region76: #{lstm_demo_forward.1} parent=55 // pred_fallthru
        _
      // Predicated region
      $region77: #{lstm_demo_forward.1} parent=55 // pred_check
        %p1550 = pneg %p308
      $region78: #{lstm_demo_forward.1} parent=55 // pred_check_branch
        %1552 = sbr.rel (%p1550) target = $region80
      $region79: #{lstm_demo_forward.1} parent=55 // pred_region
        _
      $region80: #{lstm_demo_forward.1} parent=55 // pred_fallthru
        _
      // Predicated region
      $region81: #{lstm_demo_forward.1} parent=55 // pred_check
        %p1553 = pneg %p256
      $region82: #{lstm_demo_forward.1} parent=55 // pred_check_branch
        %1555 = sbr.rel (%p1553) target = $region84
      $region83: #{lstm_demo_forward.1} parent=55 // pred_region
        _
      $region84: #{lstm_demo_forward.1} parent=55 // pred_fallthru
        _
    $region56: #{lstm_demo_forward.1} parent=5 // pred_fallthru
      _
    %p1556 = scmp.le.s32.totalorder 2, %s18
    // Predicated region
    $region85: #{lstm_demo_forward.1} parent=5 // pred_check
      %p1557 = pneg %p1556
    $region86: #{lstm_demo_forward.1} parent=5 // pred_check_branch
      %1559 = sbr.rel (%p1557) target = $region88
    $region87: #{lstm_demo_forward.1} parent=5 // pred_region
      %s1560 = ssub.s32 %s18, 2
      // Predicated region
      $region89: #{lstm_demo_forward.1} parent=87 // pred_check
        %p1561 = pneg %p288
      $region90: #{lstm_demo_forward.1} parent=87 // pred_check_branch
        %1563 = sbr.rel (%p1561) target = $region92
      $region91: #{lstm_demo_forward.1} parent=87 // pred_region
        %p1564 = scmp.lt.s32.totalorder %s24, 1
        %s1565 = scalar_select %p1564, %s24, 1
        %s1566 = smul.addr %s1565, 8
        %s1567 = scalar_lea.vmem %s10, %s1566
      $region92: #{lstm_demo_forward.1} parent=87 // pred_fallthru
        _
      // Predicated region
      $region93: #{lstm_demo_forward.1} parent=87 // pred_check
        %p1568 = pneg %p314
      $region94: #{lstm_demo_forward.1} parent=87 // pred_check_branch
        %1570 = sbr.rel (%p1568) target = $region96
      $region95: #{lstm_demo_forward.1} parent=87 // pred_region
        %p1571 = scmp.lt.s32.totalorder %s24, 1
        %s1572 = scalar_select %p1571, %s24, 1
        %s1573 = smul.addr %s1572, 8
        %s1574 = scalar_lea.vmem %s11, %s1573
      $region96: #{lstm_demo_forward.1} parent=87 // pred_fallthru
        _
    $region88: #{lstm_demo_forward.1} parent=5 // pred_fallthru
      _
  $region6: #{lstm_demo_forward.1} parent=0 // loop_footer
    %s22 = sadd.s32 1, %s18
  $region7: #{lstm_demo_forward.1} parent=0 // loop_footer_branch
    %17 = sbr.rel target = $region3
  $region8: #{lstm_demo_forward.1} parent=0 // loop_exit
    _

</llo_original>
